<compile_context>
chip_gen: v6e
topology: v6e:2x2x1
jax: 0.10.0
libtpu: 0.0.40
codegen_flags: <defaults>
</compile_context>

<pallas_src>
import functools

import jax
import jax.numpy as jnp
from jax.experimental import pallas as pl
from jax.experimental.pallas import tpu as pltpu


def _round_up(x, m):
    return (x + m - 1) // m * m


def make_lstm_kernel(T, Bp, Hp):
    """Kernel closure over static sizes.

    Refs:
      x_ref     : (T*Bp, Ep)   bf16, time-major, zero-padded input
      wih_ref   : (Ep, 4*Hp)   bf16, packed W_ih^T, gate order (i, f, o, g)
      whh_ref   : (Hp, 4*Hp)   bf16, packed W_hh^T, gate order (i, f, o, g)
      b_ref     : (1, 4*Hp)    f32,  packed b_ih + b_hh
      waff_ref  : (Hp, Np)     f32,  packed aff1 weight (col 0 real)
      baff_ref  : (1, Np)      f32,  packed aff1 bias   (col 0 real)
      o_ref     : (Bp, Np)     f32,  logits in [:, 0]
      gates_scr : (T*Bp, 4*Hp) f32 VMEM scratch for the hoisted projection
    """
    f32 = jnp.float32
    bf16 = jnp.bfloat16

    def kernel(x_ref, wih_ref, whh_ref, b_ref, waff_ref, baff_ref, o_ref,
               gates_scr):
        # Hoisted input projection for all T timesteps (bf16 MXU, f32 acc),
        # parked in VMEM so it never occupies vregs across the recurrence.
        gates_scr[...] = (
            jnp.dot(x_ref[...], wih_ref[...], preferred_element_type=f32)
            + b_ref[...])

        def gate_step(g, c):
            # sigmoid(x) == 0.5*tanh(0.5*x) + 0.5  (single EUP op per element).
            ifo = 0.5 * jnp.tanh(0.5 * g[:, :3 * Hp]) + 0.5
            g_g = jnp.tanh(g[:, 3 * Hp:])
            i_g = ifo[:, 0 * Hp:1 * Hp]
            f_g = ifo[:, 1 * Hp:2 * Hp]
            o_g = ifo[:, 2 * Hp:3 * Hp]
            c_new = f_g * c + i_g * g_g
            h_new = o_g * jnp.tanh(c_new)
            return h_new, c_new

        # t = 0: h0 == 0, so the recurrent matmul vanishes.
        c0 = jnp.zeros((Bp, Hp), f32)
        h, c = gate_step(gates_scr[pl.ds(0, Bp), :], c0)

        # Fully unrolled recurrence (T small); all slices static/tile-aligned.
        for t in range(1, T):
            g = (gates_scr[pl.ds(t * Bp, Bp), :]
                 + jnp.dot(h.astype(bf16), whh_ref[...],
                           preferred_element_type=f32))
            h, c = gate_step(g, c)

        # aff1 on the last hidden state; off the recurrence path, lane-dense.
        o_ref[...] = (jnp.dot(h, waff_ref[...], preferred_element_type=f32)
                      + baff_ref[...])

    return kernel


def pack_lstm_params(w_ih, w_hh, b_ih, b_hh, w_aff, b_aff):
    """One-time weight repacking (keep out of the per-call path).

    Returns bf16 MXU weights and f32 biases / affine, padded & gate-reordered
    to (i, f, o, g) with each gate lane-aligned to 128.
    Zero padding keeps padded lanes of h/c exactly zero inside the kernel.
    """
    f32 = jnp.float32
    bf16 = jnp.bfloat16
    H = w_hh.shape[1]
    E = w_ih.shape[1]
    Hp = _round_up(H, 128)
    Ep = _round_up(E, 128)
    Np = 128

    def split(w):  # PyTorch gate order along dim 0: (i, f, g, o)
        return w[0:H], w[H:2 * H], w[2 * H:3 * H], w[3 * H:4 * H]

    gi, gf, gg, go = split(w_ih)
    hi, hf, hg, ho = split(w_hh)
    bsum = (b_ih + b_hh).astype(f32)
    b_i, b_f, b_g, b_o = (bsum[0:H], bsum[H:2 * H],
                          bsum[2 * H:3 * H], bsum[3 * H:4 * H])

    def pad2(a, rows, cols):
        return jnp.pad(a, ((0, rows - a.shape[0]), (0, cols - a.shape[1])))

    # New column order (i, f, o, g): sigmoid slab contiguous, tanh slab last.
    wih_p = jnp.concatenate(
        [pad2(w.T.astype(f32), Ep, Hp) for w in (gi, gf, go, gg)],
        axis=1).astype(bf16)
    whh_p = jnp.concatenate(
        [pad2(w.T.astype(f32), Hp, Hp) for w in (hi, hf, ho, hg)],
        axis=1).astype(bf16)
    b_p = jnp.concatenate(
        [pad2(b.reshape(1, H), 1, Hp) for b in (b_i, b_f, b_o, b_g)], axis=1)

    waff_p = pad2(w_aff.T.astype(f32), Hp, Np)
    baff_p = pad2(b_aff.reshape(1, 1).astype(f32), 1, Np)
    return wih_p, whh_p, b_p, waff_p, baff_p


@jax.jit
def lstm_forward(x, wih_p, whh_p, b_p, waff_p, baff_p):
    """x: (B, T, E) f32; packed params from pack_lstm_params.
       Returns (B, 1) float32 logits."""
    B, T, E = x.shape
    Ep = wih_p.shape[0]
    Hp = whh_p.shape[0]
    Np = waff_p.shape[1]
    Bp = _round_up(B, 8)
    f32 = jnp.float32
    bf16 = jnp.bfloat16

    # Time-major, batch padded to 8 sublanes, E padded to 128 lanes, bf16.
    x_tm = jnp.transpose(x.astype(f32), (1, 0, 2))            # (T, B, E)
    x_pad = jnp.pad(x_tm, ((0, 0), (0, Bp - B), (0, Ep - E)))  # (T, Bp, Ep)
    x2d = x_pad.reshape(T * Bp, Ep).astype(bf16)               # (T*Bp, Ep)

    grid_spec = pltpu.PrefetchScalarGridSpec(
        num_scalar_prefetch=0,
        grid=(1,),
        in_specs=[
            pl.BlockSpec((T * Bp, Ep), lambda i: (0, 0)),      # x (whole seq)
            pl.BlockSpec((Ep, 4 * Hp), lambda i: (0, 0)),      # W_ih^T packed
            pl.BlockSpec((Hp, 4 * Hp), lambda i: (0, 0)),      # W_hh^T packed
            pl.BlockSpec((1, 4 * Hp), lambda i: (0, 0)),       # bias packed
            pl.BlockSpec((Hp, Np), lambda i: (0, 0)),          # aff1 weight
            pl.BlockSpec((1, Np), lambda i: (0, 0)),           # aff1 bias
        ],
        out_specs=pl.BlockSpec((Bp, Np), lambda i: (0, 0)),
        scratch_shapes=[pltpu.VMEM((T * Bp, 4 * Hp), f32)],
    )

    out_p = pl.pallas_call(
        make_lstm_kernel(T, Bp, Hp),
        out_shape=jax.ShapeDtypeStruct((Bp, Np), f32),
        grid_spec=grid_spec,
        compiler_params=pltpu.CompilerParams(
            dimension_semantics=("arbitrary",)),
    )(x2d, wih_p, whh_p, b_p, waff_p, baff_p)

    return out_p[:B, :1]


def lstm_reference(x, w_ih, w_hh, b_ih, b_hh, w_aff, b_aff):
    """Pure-JAX f32 reference mirroring PyTorch nn.LSTM + last-step Linear."""
    B, T, E = x.shape
    H = w_hh.shape[1]
    h = jnp.zeros((B, H), jnp.float32)
    c = jnp.zeros((B, H), jnp.float32)
    for t in range(T):
        gates = x[:, t, :] @ w_ih.T + b_ih + h @ w_hh.T + b_hh
        i = jax.nn.sigmoid(gates[:, 0 * H:1 * H])
        f = jax.nn.sigmoid(gates[:, 1 * H:2 * H])
        g = jnp.tanh(gates[:, 2 * H:3 * H])
        o = jax.nn.sigmoid(gates[:, 3 * H:4 * H])
        c = f * c + i * g
        h = o * jnp.tanh(c)
    return h @ w_aff.T + b_aff


if __name__ == "__main__":
    # aff1 = Linear(100, 1) acts on the last hidden state, so embsize = 100.
    B, T, E = 2, 8, 100
    H = E

    key = jax.random.PRNGKey(0)
    ks = jax.random.split(key, 7)
    scale = 0.1
    x = jax.random.normal(ks[0], (B, T, E), jnp.float32)
    w_ih = scale * jax.random.normal(ks[1], (4 * H, E), jnp.float32)
    w_hh = scale * jax.random.normal(ks[2], (4 * H, H), jnp.float32)
    b_ih = scale * jax.random.normal(ks[3], (4 * H,), jnp.float32)
    b_hh = scale * jax.random.normal(ks[4], (4 * H,), jnp.float32)
    w_aff = scale * jax.random.normal(ks[5], (1, H), jnp.float32)
    b_aff = scale * jax.random.normal(ks[6], (1,), jnp.float32)

    # One-time packing (outside the per-call path).
    packed = pack_lstm_params(w_ih, w_hh, b_ih, b_hh, w_aff, b_aff)
    packed = jax.block_until_ready(packed)

    out = lstm_forward(x, *packed)
    out = jax.block_until_ready(out)

    ref = lstm_reference(x, w_ih, w_hh, b_ih, b_hh, w_aff, b_aff)
    assert out.shape == (B, 1), out.shape
    # bf16 MXU operands -> relaxed tolerance (f32 accumulation + f32 state).
    max_err = float(jnp.max(jnp.abs(out - ref)))
    assert jnp.allclose(out, ref, atol=2e-2, rtol=2e-2), (out, ref, max_err)

    print("KERNEL_OK")
</pallas_src>

<mosaic_0001>
module attributes {stable_mosaic.version = 11 : i64} {
  func.func @kernel(%arg0: i32, %arg1: memref<64x128xbf16, #tpu.memory_space<vmem>>, %arg2: memref<128x512xbf16, #tpu.memory_space<vmem>>, %arg3: memref<128x512xbf16, #tpu.memory_space<vmem>>, %arg4: memref<1x512xf32, #tpu.memory_space<vmem>>, %arg5: memref<128x128xf32, #tpu.memory_space<vmem>>, %arg6: memref<1x128xf32, #tpu.memory_space<vmem>>, %arg7: memref<8x128xf32, #tpu.memory_space<vmem>>, %arg8: memref<64x512xf32, #tpu.memory_space<vmem>>) attributes {dimension_semantics = [#tpu.dimension_semantics<arbitrary>], iteration_bounds = array<i64: 1>, scalar_prefetch = 0 : i64, scratch_operands = 1 : i64, tpu.core_type = #tpu.core_type<tc>, window_params = [{pipeline_mode = #tpu.pipeline_mode<synchronous>, transform_indices = @transform_0, window_bounds = array<i64: 64, 128>}, {pipeline_mode = #tpu.pipeline_mode<synchronous>, transform_indices = @transform_1, window_bounds = array<i64: 128, 512>}, {pipeline_mode = #tpu.pipeline_mode<synchronous>, transform_indices = @transform_2, window_bounds = array<i64: 128, 512>}, {pipeline_mode = #tpu.pipeline_mode<synchronous>, transform_indices = @transform_3, window_bounds = array<i64: 1, 512>}, {pipeline_mode = #tpu.pipeline_mode<synchronous>, transform_indices = @transform_4, window_bounds = array<i64: 128, 128>}, {pipeline_mode = #tpu.pipeline_mode<synchronous>, transform_indices = @transform_5, window_bounds = array<i64: 1, 128>}, {pipeline_mode = #tpu.pipeline_mode<synchronous>, transform_indices = @transform_6, window_bounds = array<i64: 8, 128>}]} {
    %c0 = arith.constant 0 : index
    %c0_0 = arith.constant 0 : index
    %0 = vector.load %arg1[%c0, %c0_0] : memref<64x128xbf16, #tpu.memory_space<vmem>>, vector<64x128xbf16>
    %c0_1 = arith.constant 0 : index
    %c0_2 = arith.constant 0 : index
    %1 = vector.load %arg2[%c0_1, %c0_2] : memref<128x512xbf16, #tpu.memory_space<vmem>>, vector<128x512xbf16>
    %cst = arith.constant dense<0.000000e+00> : vector<64x512xf32>
    %2 = tpu.matmul %0, %1, %cst {dimension_numbers = #tpu.dot_dimension_numbers<[1], [0], [0], [1], [0, 0, 1, 1], [], []>} : vector<64x128xbf16>, vector<128x512xbf16>, vector<64x512xf32> -> vector<64x512xf32>
    %c0_3 = arith.constant 0 : index
    %c0_4 = arith.constant 0 : index
    %3 = vector.load %arg4[%c0_3, %c0_4] : memref<1x512xf32, #tpu.memory_space<vmem>>, vector<1x512xf32>
    %4 = vector.broadcast %3 : vector<1x512xf32> to vector<64x512xf32>
    %5 = arith.addf %2, %4 : vector<64x512xf32>
    %c0_5 = arith.constant 0 : index
    %c0_6 = arith.constant 0 : index
    %6 = vector.load %arg8[%c0_5, %c0_6] : memref<64x512xf32, #tpu.memory_space<vmem>>, vector<64x512xf32>
    tpu.vector_store %arg8[%c0_5, %c0_6], %5 {strides = array<i32>} : memref<64x512xf32, #tpu.memory_space<vmem>>, vector<64x512xf32>,
    %cst_7 = arith.constant 0.000000e+00 : f32
    %7 = vector.broadcast %cst_7 : f32 to vector<8x128xf32>
    %c0_8 = arith.constant 0 : index
    %c0_9 = arith.constant 0 : index
    %8 = vector.load %arg8[%c0_8, %c0_9] : memref<64x512xf32, #tpu.memory_space<vmem>>, vector<8x512xf32>
    %9 = vector.extract_strided_slice %8 {offsets = [0, 0], sizes = [8, 384], strides = [1, 1]} : vector<8x512xf32> to vector<8x384xf32>
    %cst_10 = arith.constant 5.000000e-01 : f32
    %10 = vector.broadcast %cst_10 : f32 to vector<8x384xf32>
    %11 = arith.mulf %10, %9 : vector<8x384xf32>
    %12 = math.tanh %11 : vector<8x384xf32>
    %cst_11 = arith.constant 5.000000e-01 : f32
    %13 = vector.broadcast %cst_11 : f32 to vector<8x384xf32>
    %14 = arith.mulf %13, %12 : vector<8x384xf32>
    %cst_12 = arith.constant 5.000000e-01 : f32
    %15 = vector.broadcast %cst_12 : f32 to vector<8x384xf32>
    %16 = arith.addf %14, %15 : vector<8x384xf32>
    %17 = vector.extract_strided_slice %8 {offsets = [0, 384], sizes = [8, 128], strides = [1, 1]} : vector<8x512xf32> to vector<8x128xf32>
    %18 = math.tanh %17 : vector<8x128xf32>
    %19 = vector.extract_strided_slice %16 {offsets = [0, 0], sizes = [8, 128], strides = [1, 1]} : vector<8x384xf32> to vector<8x128xf32>
    %20 = vector.extract_strided_slice %16 {offsets = [0, 128], sizes = [8, 128], strides = [1, 1]} : vector<8x384xf32> to vector<8x128xf32>
    %21 = vector.extract_strided_slice %16 {offsets = [0, 256], sizes = [8, 128], strides = [1, 1]} : vector<8x384xf32> to vector<8x128xf32>
    %22 = arith.mulf %20, %7 : vector<8x128xf32>
    %23 = arith.mulf %19, %18 : vector<8x128xf32>
    %24 = arith.addf %22, %23 : vector<8x128xf32>
    %25 = math.tanh %24 : vector<8x128xf32>
    %26 = arith.mulf %21, %25 : vector<8x128xf32>
    %c8 = arith.constant 8 : index
    %c0_13 = arith.constant 0 : index
    %27 = vector.load %arg8[%c8, %c0_13] : memref<64x512xf32, #tpu.memory_space<vmem>>, vector<8x512xf32>
    %28 = arith.truncf %26 : vector<8x128xf32> to vector<8x128xbf16>
    %c0_14 = arith.constant 0 : index
    %c0_15 = arith.constant 0 : index
    %29 = vector.load %arg3[%c0_14, %c0_15] : memref<128x512xbf16, #tpu.memory_space<vmem>>, vector<128x512xbf16>
    %cst_16 = arith.constant dense<0.000000e+00> : vector<8x512xf32>
    %30 = tpu.matmul %28, %29, %cst_16 {dimension_numbers = #tpu.dot_dimension_numbers<[1], [0], [0], [1], [0, 0, 1, 1], [], []>} : vector<8x128xbf16>, vector<128x512xbf16>, vector<8x512xf32> -> vector<8x512xf32>
    %31 = arith.addf %27, %30 : vector<8x512xf32>
    %32 = vector.extract_strided_slice %31 {offsets = [0, 0], sizes = [8, 384], strides = [1, 1]} : vector<8x512xf32> to vector<8x384xf32>
    %cst_17 = arith.constant 5.000000e-01 : f32
    %33 = vector.broadcast %cst_17 : f32 to vector<8x384xf32>
    %34 = arith.mulf %33, %32 : vector<8x384xf32>
    %35 = math.tanh %34 : vector<8x384xf32>
    %cst_18 = arith.constant 5.000000e-01 : f32
    %36 = vector.broadcast %cst_18 : f32 to vector<8x384xf32>
    %37 = arith.mulf %36, %35 : vector<8x384xf32>
    %cst_19 = arith.constant 5.000000e-01 : f32
    %38 = vector.broadcast %cst_19 : f32 to vector<8x384xf32>
    %39 = arith.addf %37, %38 : vector<8x384xf32>
    %40 = vector.extract_strided_slice %31 {offsets = [0, 384], sizes = [8, 128], strides = [1, 1]} : vector<8x512xf32> to vector<8x128xf32>
    %41 = math.tanh %40 : vector<8x128xf32>
    %42 = vector.extract_strided_slice %39 {offsets = [0, 0], sizes = [8, 128], strides = [1, 1]} : vector<8x384xf32> to vector<8x128xf32>
    %43 = vector.extract_strided_slice %39 {offsets = [0, 128], sizes = [8, 128], strides = [1, 1]} : vector<8x384xf32> to vector<8x128xf32>
    %44 = vector.extract_strided_slice %39 {offsets = [0, 256], sizes = [8, 128], strides = [1, 1]} : vector<8x384xf32> to vector<8x128xf32>
    %45 = arith.mulf %43, %24 : vector<8x128xf32>
    %46 = arith.mulf %42, %41 : vector<8x128xf32>
    %47 = arith.addf %45, %46 : vector<8x128xf32>
    %48 = math.tanh %47 : vector<8x128xf32>
    %49 = arith.mulf %44, %48 : vector<8x128xf32>
    %c16 = arith.constant 16 : index
    %c0_20 = arith.constant 0 : index
    %50 = vector.load %arg8[%c16, %c0_20] : memref<64x512xf32, #tpu.memory_space<vmem>>, vector<8x512xf32>
    %51 = arith.truncf %49 : vector<8x128xf32> to vector<8x128xbf16>
    %c0_21 = arith.constant 0 : index
    %c0_22 = arith.constant 0 : index
    %52 = vector.load %arg3[%c0_21, %c0_22] : memref<128x512xbf16, #tpu.memory_space<vmem>>, vector<128x512xbf16>
    %cst_23 = arith.constant dense<0.000000e+00> : vector<8x512xf32>
    %53 = tpu.matmul %51, %52, %cst_23 {dimension_numbers = #tpu.dot_dimension_numbers<[1], [0], [0], [1], [0, 0, 1, 1], [], []>} : vector<8x128xbf16>, vector<128x512xbf16>, vector<8x512xf32> -> vector<8x512xf32>
    %54 = arith.addf %50, %53 : vector<8x512xf32>
    %55 = vector.extract_strided_slice %54 {offsets = [0, 0], sizes = [8, 384], strides = [1, 1]} : vector<8x512xf32> to vector<8x384xf32>
    %cst_24 = arith.constant 5.000000e-01 : f32
    %56 = vector.broadcast %cst_24 : f32 to vector<8x384xf32>
    %57 = arith.mulf %56, %55 : vector<8x384xf32>
    %58 = math.tanh %57 : vector<8x384xf32>
    %cst_25 = arith.constant 5.000000e-01 : f32
    %59 = vector.broadcast %cst_25 : f32 to vector<8x384xf32>
    %60 = arith.mulf %59, %58 : vector<8x384xf32>
    %cst_26 = arith.constant 5.000000e-01 : f32
    %61 = vector.broadcast %cst_26 : f32 to vector<8x384xf32>
    %62 = arith.addf %60, %61 : vector<8x384xf32>
    %63 = vector.extract_strided_slice %54 {offsets = [0, 384], sizes = [8, 128], strides = [1, 1]} : vector<8x512xf32> to vector<8x128xf32>
    %64 = math.tanh %63 : vector<8x128xf32>
    %65 = vector.extract_strided_slice %62 {offsets = [0, 0], sizes = [8, 128], strides = [1, 1]} : vector<8x384xf32> to vector<8x128xf32>
    %66 = vector.extract_strided_slice %62 {offsets = [0, 128], sizes = [8, 128], strides = [1, 1]} : vector<8x384xf32> to vector<8x128xf32>
    %67 = vector.extract_strided_slice %62 {offsets = [0, 256], sizes = [8, 128], strides = [1, 1]} : vector<8x384xf32> to vector<8x128xf32>
    %68 = arith.mulf %66, %47 : vector<8x128xf32>
    %69 = arith.mulf %65, %64 : vector<8x128xf32>
    %70 = arith.addf %68, %69 : vector<8x128xf32>
    %71 = math.tanh %70 : vector<8x128xf32>
    %72 = arith.mulf %67, %71 : vector<8x128xf32>
    %c24 = arith.constant 24 : index
    %c0_27 = arith.constant 0 : index
    %73 = vector.load %arg8[%c24, %c0_27] : memref<64x512xf32, #tpu.memory_space<vmem>>, vector<8x512xf32>
    %74 = arith.truncf %72 : vector<8x128xf32> to vector<8x128xbf16>
    %c0_28 = arith.constant 0 : index
    %c0_29 = arith.constant 0 : index
    %75 = vector.load %arg3[%c0_28, %c0_29] : memref<128x512xbf16, #tpu.memory_space<vmem>>, vector<128x512xbf16>
    %cst_30 = arith.constant dense<0.000000e+00> : vector<8x512xf32>
    %76 = tpu.matmul %74, %75, %cst_30 {dimension_numbers = #tpu.dot_dimension_numbers<[1], [0], [0], [1], [0, 0, 1, 1], [], []>} : vector<8x128xbf16>, vector<128x512xbf16>, vector<8x512xf32> -> vector<8x512xf32>
    %77 = arith.addf %73, %76 : vector<8x512xf32>
    %78 = vector.extract_strided_slice %77 {offsets = [0, 0], sizes = [8, 384], strides = [1, 1]} : vector<8x512xf32> to vector<8x384xf32>
    %cst_31 = arith.constant 5.000000e-01 : f32
    %79 = vector.broadcast %cst_31 : f32 to vector<8x384xf32>
    %80 = arith.mulf %79, %78 : vector<8x384xf32>
    %81 = math.tanh %80 : vector<8x384xf32>
    %cst_32 = arith.constant 5.000000e-01 : f32
    %82 = vector.broadcast %cst_32 : f32 to vector<8x384xf32>
    %83 = arith.mulf %82, %81 : vector<8x384xf32>
    %cst_33 = arith.constant 5.000000e-01 : f32
    %84 = vector.broadcast %cst_33 : f32 to vector<8x384xf32>
    %85 = arith.addf %83, %84 : vector<8x384xf32>
    %86 = vector.extract_strided_slice %77 {offsets = [0, 384], sizes = [8, 128], strides = [1, 1]} : vector<8x512xf32> to vector<8x128xf32>
    %87 = math.tanh %86 : vector<8x128xf32>
    %88 = vector.extract_strided_slice %85 {offsets = [0, 0], sizes = [8, 128], strides = [1, 1]} : vector<8x384xf32> to vector<8x128xf32>
    %89 = vector.extract_strided_slice %85 {offsets = [0, 128], sizes = [8, 128], strides = [1, 1]} : vector<8x384xf32> to vector<8x128xf32>
    %90 = vector.extract_strided_slice %85 {offsets = [0, 256], sizes = [8, 128], strides = [1, 1]} : vector<8x384xf32> to vector<8x128xf32>
    %91 = arith.mulf %89, %70 : vector<8x128xf32>
    %92 = arith.mulf %88, %87 : vector<8x128xf32>
    %93 = arith.addf %91, %92 : vector<8x128xf32>
    %94 = math.tanh %93 : vector<8x128xf32>
    %95 = arith.mulf %90, %94 : vector<8x128xf32>
    %c32 = arith.constant 32 : index
    %c0_34 = arith.constant 0 : index
    %96 = vector.load %arg8[%c32, %c0_34] : memref<64x512xf32, #tpu.memory_space<vmem>>, vector<8x512xf32>
    %97 = arith.truncf %95 : vector<8x128xf32> to vector<8x128xbf16>
    %c0_35 = arith.constant 0 : index
    %c0_36 = arith.constant 0 : index
    %98 = vector.load %arg3[%c0_35, %c0_36] : memref<128x512xbf16, #tpu.memory_space<vmem>>, vector<128x512xbf16>
    %cst_37 = arith.constant dense<0.000000e+00> : vector<8x512xf32>
    %99 = tpu.matmul %97, %98, %cst_37 {dimension_numbers = #tpu.dot_dimension_numbers<[1], [0], [0], [1], [0, 0, 1, 1], [], []>} : vector<8x128xbf16>, vector<128x512xbf16>, vector<8x512xf32> -> vector<8x512xf32>
    %100 = arith.addf %96, %99 : vector<8x512xf32>
    %101 = vector.extract_strided_slice %100 {offsets = [0, 0], sizes = [8, 384], strides = [1, 1]} : vector<8x512xf32> to vector<8x384xf32>
    %cst_38 = arith.constant 5.000000e-01 : f32
    %102 = vector.broadcast %cst_38 : f32 to vector<8x384xf32>
    %103 = arith.mulf %102, %101 : vector<8x384xf32>
    %104 = math.tanh %103 : vector<8x384xf32>
    %cst_39 = arith.constant 5.000000e-01 : f32
    %105 = vector.broadcast %cst_39 : f32 to vector<8x384xf32>
    %106 = arith.mulf %105, %104 : vector<8x384xf32>
    %cst_40 = arith.constant 5.000000e-01 : f32
    %107 = vector.broadcast %cst_40 : f32 to vector<8x384xf32>
    %108 = arith.addf %106, %107 : vector<8x384xf32>
    %109 = vector.extract_strided_slice %100 {offsets = [0, 384], sizes = [8, 128], strides = [1, 1]} : vector<8x512xf32> to vector<8x128xf32>
    %110 = math.tanh %109 : vector<8x128xf32>
    %111 = vector.extract_strided_slice %108 {offsets = [0, 0], sizes = [8, 128], strides = [1, 1]} : vector<8x384xf32> to vector<8x128xf32>
    %112 = vector.extract_strided_slice %108 {offsets = [0, 128], sizes = [8, 128], strides = [1, 1]} : vector<8x384xf32> to vector<8x128xf32>
    %113 = vector.extract_strided_slice %108 {offsets = [0, 256], sizes = [8, 128], strides = [1, 1]} : vector<8x384xf32> to vector<8x128xf32>
    %114 = arith.mulf %112, %93 : vector<8x128xf32>
    %115 = arith.mulf %111, %110 : vector<8x128xf32>
    %116 = arith.addf %114, %115 : vector<8x128xf32>
    %117 = math.tanh %116 : vector<8x128xf32>
    %118 = arith.mulf %113, %117 : vector<8x128xf32>
    %c40 = arith.constant 40 : index
    %c0_41 = arith.constant 0 : index
    %119 = vector.load %arg8[%c40, %c0_41] : memref<64x512xf32, #tpu.memory_space<vmem>>, vector<8x512xf32>
    %120 = arith.truncf %118 : vector<8x128xf32> to vector<8x128xbf16>
    %c0_42 = arith.constant 0 : index
    %c0_43 = arith.constant 0 : index
    %121 = vector.load %arg3[%c0_42, %c0_43] : memref<128x512xbf16, #tpu.memory_space<vmem>>, vector<128x512xbf16>
    %cst_44 = arith.constant dense<0.000000e+00> : vector<8x512xf32>
    %122 = tpu.matmul %120, %121, %cst_44 {dimension_numbers = #tpu.dot_dimension_numbers<[1], [0], [0], [1], [0, 0, 1, 1], [], []>} : vector<8x128xbf16>, vector<128x512xbf16>, vector<8x512xf32> -> vector<8x512xf32>
    %123 = arith.addf %119, %122 : vector<8x512xf32>
    %124 = vector.extract_strided_slice %123 {offsets = [0, 0], sizes = [8, 384], strides = [1, 1]} : vector<8x512xf32> to vector<8x384xf32>
    %cst_45 = arith.constant 5.000000e-01 : f32
    %125 = vector.broadcast %cst_45 : f32 to vector<8x384xf32>
    %126 = arith.mulf %125, %124 : vector<8x384xf32>
    %127 = math.tanh %126 : vector<8x384xf32>
    %cst_46 = arith.constant 5.000000e-01 : f32
    %128 = vector.broadcast %cst_46 : f32 to vector<8x384xf32>
    %129 = arith.mulf %128, %127 : vector<8x384xf32>
    %cst_47 = arith.constant 5.000000e-01 : f32
    %130 = vector.broadcast %cst_47 : f32 to vector<8x384xf32>
    %131 = arith.addf %129, %130 : vector<8x384xf32>
    %132 = vector.extract_strided_slice %123 {offsets = [0, 384], sizes = [8, 128], strides = [1, 1]} : vector<8x512xf32> to vector<8x128xf32>
    %133 = math.tanh %132 : vector<8x128xf32>
    %134 = vector.extract_strided_slice %131 {offsets = [0, 0], sizes = [8, 128], strides = [1, 1]} : vector<8x384xf32> to vector<8x128xf32>
    %135 = vector.extract_strided_slice %131 {offsets = [0, 128], sizes = [8, 128], strides = [1, 1]} : vector<8x384xf32> to vector<8x128xf32>
    %136 = vector.extract_strided_slice %131 {offsets = [0, 256], sizes = [8, 128], strides = [1, 1]} : vector<8x384xf32> to vector<8x128xf32>
    %137 = arith.mulf %135, %116 : vector<8x128xf32>
    %138 = arith.mulf %134, %133 : vector<8x128xf32>
    %139 = arith.addf %137, %138 : vector<8x128xf32>
    %140 = math.tanh %139 : vector<8x128xf32>
    %141 = arith.mulf %136, %140 : vector<8x128xf32>
    %c48 = arith.constant 48 : index
    %c0_48 = arith.constant 0 : index
    %142 = vector.load %arg8[%c48, %c0_48] : memref<64x512xf32, #tpu.memory_space<vmem>>, vector<8x512xf32>
    %143 = arith.truncf %141 : vector<8x128xf32> to vector<8x128xbf16>
    %c0_49 = arith.constant 0 : index
    %c0_50 = arith.constant 0 : index
    %144 = vector.load %arg3[%c0_49, %c0_50] : memref<128x512xbf16, #tpu.memory_space<vmem>>, vector<128x512xbf16>
    %cst_51 = arith.constant dense<0.000000e+00> : vector<8x512xf32>
    %145 = tpu.matmul %143, %144, %cst_51 {dimension_numbers = #tpu.dot_dimension_numbers<[1], [0], [0], [1], [0, 0, 1, 1], [], []>} : vector<8x128xbf16>, vector<128x512xbf16>, vector<8x512xf32> -> vector<8x512xf32>
    %146 = arith.addf %142, %145 : vector<8x512xf32>
    %147 = vector.extract_strided_slice %146 {offsets = [0, 0], sizes = [8, 384], strides = [1, 1]} : vector<8x512xf32> to vector<8x384xf32>
    %cst_52 = arith.constant 5.000000e-01 : f32
    %148 = vector.broadcast %cst_52 : f32 to vector<8x384xf32>
    %149 = arith.mulf %148, %147 : vector<8x384xf32>
    %150 = math.tanh %149 : vector<8x384xf32>
    %cst_53 = arith.constant 5.000000e-01 : f32
    %151 = vector.broadcast %cst_53 : f32 to vector<8x384xf32>
    %152 = arith.mulf %151, %150 : vector<8x384xf32>
    %cst_54 = arith.constant 5.000000e-01 : f32
    %153 = vector.broadcast %cst_54 : f32 to vector<8x384xf32>
    %154 = arith.addf %152, %153 : vector<8x384xf32>
    %155 = vector.extract_strided_slice %146 {offsets = [0, 384], sizes = [8, 128], strides = [1, 1]} : vector<8x512xf32> to vector<8x128xf32>
    %156 = math.tanh %155 : vector<8x128xf32>
    %157 = vector.extract_strided_slice %154 {offsets = [0, 0], sizes = [8, 128], strides = [1, 1]} : vector<8x384xf32> to vector<8x128xf32>
    %158 = vector.extract_strided_slice %154 {offsets = [0, 128], sizes = [8, 128], strides = [1, 1]} : vector<8x384xf32> to vector<8x128xf32>
    %159 = vector.extract_strided_slice %154 {offsets = [0, 256], sizes = [8, 128], strides = [1, 1]} : vector<8x384xf32> to vector<8x128xf32>
    %160 = arith.mulf %158, %139 : vector<8x128xf32>
    %161 = arith.mulf %157, %156 : vector<8x128xf32>
    %162 = arith.addf %160, %161 : vector<8x128xf32>
    %163 = math.tanh %162 : vector<8x128xf32>
    %164 = arith.mulf %159, %163 : vector<8x128xf32>
    %c56 = arith.constant 56 : index
    %c0_55 = arith.constant 0 : index
    %165 = vector.load %arg8[%c56, %c0_55] : memref<64x512xf32, #tpu.memory_space<vmem>>, vector<8x512xf32>
    %166 = arith.truncf %164 : vector<8x128xf32> to vector<8x128xbf16>
    %c0_56 = arith.constant 0 : index
    %c0_57 = arith.constant 0 : index
    %167 = vector.load %arg3[%c0_56, %c0_57] : memref<128x512xbf16, #tpu.memory_space<vmem>>, vector<128x512xbf16>
    %cst_58 = arith.constant dense<0.000000e+00> : vector<8x512xf32>
    %168 = tpu.matmul %166, %167, %cst_58 {dimension_numbers = #tpu.dot_dimension_numbers<[1], [0], [0], [1], [0, 0, 1, 1], [], []>} : vector<8x128xbf16>, vector<128x512xbf16>, vector<8x512xf32> -> vector<8x512xf32>
    %169 = arith.addf %165, %168 : vector<8x512xf32>
    %170 = vector.extract_strided_slice %169 {offsets = [0, 0], sizes = [8, 384], strides = [1, 1]} : vector<8x512xf32> to vector<8x384xf32>
    %cst_59 = arith.constant 5.000000e-01 : f32
    %171 = vector.broadcast %cst_59 : f32 to vector<8x384xf32>
    %172 = arith.mulf %171, %170 : vector<8x384xf32>
    %173 = math.tanh %172 : vector<8x384xf32>
    %cst_60 = arith.constant 5.000000e-01 : f32
    %174 = vector.broadcast %cst_60 : f32 to vector<8x384xf32>
    %175 = arith.mulf %174, %173 : vector<8x384xf32>
    %cst_61 = arith.constant 5.000000e-01 : f32
    %176 = vector.broadcast %cst_61 : f32 to vector<8x384xf32>
    %177 = arith.addf %175, %176 : vector<8x384xf32>
    %178 = vector.extract_strided_slice %169 {offsets = [0, 384], sizes = [8, 128], strides = [1, 1]} : vector<8x512xf32> to vector<8x128xf32>
    %179 = math.tanh %178 : vector<8x128xf32>
    %180 = vector.extract_strided_slice %177 {offsets = [0, 0], sizes = [8, 128], strides = [1, 1]} : vector<8x384xf32> to vector<8x128xf32>
    %181 = vector.extract_strided_slice %177 {offsets = [0, 128], sizes = [8, 128], strides = [1, 1]} : vector<8x384xf32> to vector<8x128xf32>
    %182 = vector.extract_strided_slice %177 {offsets = [0, 256], sizes = [8, 128], strides = [1, 1]} : vector<8x384xf32> to vector<8x128xf32>
    %183 = arith.mulf %181, %162 : vector<8x128xf32>
    %184 = arith.mulf %180, %179 : vector<8x128xf32>
    %185 = arith.addf %183, %184 : vector<8x128xf32>
    %186 = math.tanh %185 : vector<8x128xf32>
    %187 = arith.mulf %182, %186 : vector<8x128xf32>
    %c0_62 = arith.constant 0 : index
    %c0_63 = arith.constant 0 : index
    %188 = vector.load %arg5[%c0_62, %c0_63] : memref<128x128xf32, #tpu.memory_space<vmem>>, vector<128x128xf32>
    %cst_64 = arith.constant dense<0.000000e+00> : vector<8x128xf32>
    %189 = tpu.matmul %187, %188, %cst_64 {dimension_numbers = #tpu.dot_dimension_numbers<[1], [0], [0], [1], [0, 0, 1, 1], [], []>} : vector<8x128xf32>, vector<128x128xf32>, vector<8x128xf32> -> vector<8x128xf32>
    %c0_65 = arith.constant 0 : index
    %c0_66 = arith.constant 0 : index
    %190 = vector.load %arg6[%c0_65, %c0_66] : memref<1x128xf32, #tpu.memory_space<vmem>>, vector<1x128xf32>
    %191 = vector.broadcast %190 : vector<1x128xf32> to vector<8x128xf32>
    %192 = arith.addf %189, %191 : vector<8x128xf32>
    %c0_67 = arith.constant 0 : index
    %c0_68 = arith.constant 0 : index
    %193 = vector.load %arg7[%c0_67, %c0_68] : memref<8x128xf32, #tpu.memory_space<vmem>>, vector<8x128xf32>
    tpu.vector_store %arg7[%c0_67, %c0_68], %192 {strides = array<i32>} : memref<8x128xf32, #tpu.memory_space<vmem>>, vector<8x128xf32>,
    return
  }
  func.func @transform_0(%arg0: i32) -> (i32, i32) {
    %c0_i32 = arith.constant 0 : i32
    %c0_i32_0 = arith.constant 0 : i32
    %c0_i32_1 = arith.constant 0 : i32
    return %c0_i32, %c0_i32_0 : i32, i32
  }
  func.func @transform_1(%arg0: i32) -> (i32, i32) {
    %c0_i32 = arith.constant 0 : i32
    %c0_i32_0 = arith.constant 0 : i32
    %c0_i32_1 = arith.constant 0 : i32
    return %c0_i32, %c0_i32_0 : i32, i32
  }
  func.func @transform_2(%arg0: i32) -> (i32, i32) {
    %c0_i32 = arith.constant 0 : i32
    %c0_i32_0 = arith.constant 0 : i32
    %c0_i32_1 = arith.constant 0 : i32
    return %c0_i32, %c0_i32_0 : i32, i32
  }
  func.func @transform_3(%arg0: i32) -> (i32, i32) {
    %c0_i32 = arith.constant 0 : i32
    %c0_i32_0 = arith.constant 0 : i32
    %c0_i32_1 = arith.constant 0 : i32
    return %c0_i32, %c0_i32_0 : i32, i32
  }
  func.func @transform_4(%arg0: i32) -> (i32, i32) {
    %c0_i32 = arith.constant 0 : i32
    %c0_i32_0 = arith.constant 0 : i32
    %c0_i32_1 = arith.constant 0 : i32
    return %c0_i32, %c0_i32_0 : i32, i32
  }
  func.func @transform_5(%arg0: i32) -> (i32, i32) {
    %c0_i32 = arith.constant 0 : i32
    %c0_i32_0 = arith.constant 0 : i32
    %c0_i32_1 = arith.constant 0 : i32
    return %c0_i32, %c0_i32_0 : i32, i32
  }
  func.func @transform_6(%arg0: i32) -> (i32, i32) {
    %c0_i32 = arith.constant 0 : i32
    %c0_i32_0 = arith.constant 0 : i32
    %c0_i32_1 = arith.constant 0 : i32
    return %c0_i32, %c0_i32_0 : i32, i32
  }
}

</mosaic_0001>

<llo_original>
// kernel: lstm_forward.1
$region0: #{lstm_forward.1}
  #allocation0 [shape = 'u32[]', space=smem, size = 0x4, offset = 0x4, fixed_abs, tag = 'smem constant byte address 0x4 - core index']
  #allocation1 [shape = 'u32[144,128]{1,0:T(1,128)}', space=vmem, size = 0x12000, scoped, tag = 'internal scratch']
  #allocation2 [shape = 'f32[64,512]{1,0:T(8,128)}', space=vmem, size = 0x20000, scoped, tag = 'scratch operand']
  %s0 = inlined_call_operand.vmem [shape: bf16[64,128], index: 0, kind: input, shape index: {}]
  %s1 = inlined_call_operand.hbm [shape: bf16[128,512], index: 1, kind: input, shape index: {}]
  %s2 = inlined_call_operand.hbm [shape: bf16[128,512], index: 2, kind: input, shape index: {}]
  %s3 = inlined_call_operand.vmem [shape: f32[1,512], index: 3, kind: input, shape index: {}]
  %s4 = inlined_call_operand.hbm [shape: f32[128,128], index: 4, kind: input, shape index: {}]
  %s5 = inlined_call_operand.vmem [shape: f32[1,128], index: 5, kind: input, shape index: {}]
  %s6 = inlined_call_operand.vmem [shape: f32[8,128], index: 6, kind: output, shape index: {}]
  %s7 = sld [smem:[#allocation0]]
  $region46: #{lstm_forward.1} parent=0
    _
  %s9 = ssub.s32 1, %s7
  %s10 = scalar_select 0, %s9, %s7
  $region1: #{lstm_forward.1} parent=0
    #allocation3 [shape = 'u8[131072]{0}', space=vmem, size = 0x20000, scoped, tag = 'input window, operand 1, single buffered']
    #allocation4 [shape = 's32[1]{0}', space=sflag, size = 0x4, scoped, tag = 'scoped memory for lstm_forward.1']
    #allocation5 [shape = 'u8[131072]{0}', space=vmem, size = 0x20000, scoped, tag = 'input window, operand 2, single buffered']
    #allocation6 [shape = 's32[1]{0}', space=sflag, size = 0x4, scoped, tag = 'scoped memory for lstm_forward.1']
    #allocation7 [shape = 'u8[65536]{0}', space=vmem, size = 0x10000, scoped, tag = 'input window, operand 4, single buffered']
    %11 = vsyncpa [#allocation4], 0
    %12 = vsyncpa [#allocation6], 0
    // Predicated region
    $region2: #{lstm_forward.1} parent=1 // pred_check
      _
    $region3: #{lstm_forward.1} parent=1 // pred_check_branch
      %14 = sbr.rel (0) target = $region5
    $region4: #{lstm_forward.1} parent=1 // pred_region
      _
    $region5: #{lstm_forward.1} parent=1 // pred_fallthru
      _
    // Predicated region
    $region6: #{lstm_forward.1} parent=1 // pred_check
      _
    $region7: #{lstm_forward.1} parent=1 // pred_check_branch
      %16 = sbr.rel (0) target = $region9
    $region8: #{lstm_forward.1} parent=1 // pred_region
      %s18 = ssub.s32 4096, 4096
      %19 = vsyncadd [#allocation4], %s18
      %s20 = sshll.u32 [#allocation3], 4
      %s21 = int_to_ptr.vmem [resolvable:$true] %s20
      %26 = dma.hbm_to_vmem [thread:$0]  %s1, 4096, %s21, [#allocation4], 256, 256, 16
    $region9: #{lstm_forward.1} parent=1 // pred_fallthru
      _
    // Predicated region
    $region10: #{lstm_forward.1} parent=1 // pred_check
      _
    $region11: #{lstm_forward.1} parent=1 // pred_check_branch
      %28 = sbr.rel (0) target = $region13
    $region12: #{lstm_forward.1} parent=1 // pred_region
      %s30 = ssub.s32 4096, 4096
      %31 = vsyncadd [#allocation6], %s30
      %s32 = sshll.u32 [#allocation5], 4
      %s33 = int_to_ptr.vmem [resolvable:$true] %s32
      %38 = dma.hbm_to_vmem [thread:$0]  %s2, 4096, %s33, [#allocation6], 256, 256, 16
    $region13: #{lstm_forward.1} parent=1 // pred_fallthru
      _
    // Predicated region
    $region14: #{lstm_forward.1} parent=1 // pred_check
      _
    $region15: #{lstm_forward.1} parent=1 // pred_check_branch
      %40 = sbr.rel (0) target = $region17
    $region16: #{lstm_forward.1} parent=1 // pred_region
      _
    $region17: #{lstm_forward.1} parent=1 // pred_fallthru
      _
    // Predicated region
    $region18: #{lstm_forward.1} parent=1 // pred_check
      _
    $region19: #{lstm_forward.1} parent=1 // pred_check_branch
      %42 = sbr.rel (0) target = $region21
    $region20: #{lstm_forward.1} parent=1 // pred_region
      %s44 = ssub.s32 2048, 2048
      %45 = vsyncadd [#allocation6], %s44
      %s46 = sshll.u32 [#allocation7], 4
      %s47 = int_to_ptr.vmem [resolvable:$true] %s46
      %52 = dma.hbm_to_vmem [thread:$0]  %s4, 2048, %s47, [#allocation6], 128, 128, 8
    $region21: #{lstm_forward.1} parent=1 // pred_fallthru
      _
    // Predicated region
    $region22: #{lstm_forward.1} parent=1 // pred_check
      _
    $region23: #{lstm_forward.1} parent=1 // pred_check_branch
      %54 = sbr.rel (0) target = $region25
    $region24: #{lstm_forward.1} parent=1 // pred_region
      _
    $region25: #{lstm_forward.1} parent=1 // pred_fallthru
      _
    // Predicated region
    $region26: #{lstm_forward.1} parent=1 // pred_check
      _
    $region27: #{lstm_forward.1} parent=1 // pred_check_branch
      %56 = sbr.rel (0) target = $region29
    $region28: #{lstm_forward.1} parent=1 // pred_region
      %57 = dma.done [#allocation4], 4096
    $region29: #{lstm_forward.1} parent=1 // pred_fallthru
      _
    // Predicated region
    $region30: #{lstm_forward.1} parent=1 // pred_check
      _
    $region31: #{lstm_forward.1} parent=1 // pred_check_branch
      %59 = sbr.rel (0) target = $region33
    $region32: #{lstm_forward.1} parent=1 // pred_region
      %60 = dma.done [#allocation6], 4096
    $region33: #{lstm_forward.1} parent=1 // pred_fallthru
      _
    // Predicated region
    $region34: #{lstm_forward.1} parent=1 // pred_check
      _
    $region35: #{lstm_forward.1} parent=1 // pred_check_branch
      %62 = sbr.rel (0) target = $region37
    $region36: #{lstm_forward.1} parent=1 // pred_region
      %63 = dma.done [#allocation6], 2048
    $region37: #{lstm_forward.1} parent=1 // pred_fallthru
      _
    %v65 = vld [vmem:[%s0] sm:$0xf]
    %v66 = vld [vmem:[%s0 + $0x4] sm:$0xf]
    %v67 = vld [vmem:[%s0 + $0x8] sm:$0xf]
    %v68 = vld [vmem:[%s0 + $0xc] sm:$0xf]
    %v69 = vld [vmem:[%s0 + $0x10] sm:$0xf]
    %v70 = vld [vmem:[%s0 + $0x14] sm:$0xf]
    %v71 = vld [vmem:[%s0 + $0x18] sm:$0xf]
    %v72 = vld [vmem:[%s0 + $0x1c] sm:$0xf]
    %v73 = vld [vmem:[#allocation3] sm:$0xff]
    %v74 = vld [vmem:[#allocation3 + $0x8] sm:$0xff]
    %v75 = vld [vmem:[#allocation3 + $0x10] sm:$0xff]
    %v76 = vld [vmem:[#allocation3 + $0x18] sm:$0xff]
    %v77 = vld [vmem:[#allocation3 + $0x20] sm:$0xff]
    %v78 = vld [vmem:[#allocation3 + $0x28] sm:$0xff]
    %v79 = vld [vmem:[#allocation3 + $0x30] sm:$0xff]
    %v80 = vld [vmem:[#allocation3 + $0x38] sm:$0xff]
    %v81 = vld [vmem:[#allocation3 + $0x40] sm:$0xff]
    %v82 = vld [vmem:[#allocation3 + $0x48] sm:$0xff]
    %v83 = vld [vmem:[#allocation3 + $0x50] sm:$0xff]
    %v84 = vld [vmem:[#allocation3 + $0x58] sm:$0xff]
    %v85 = vld [vmem:[#allocation3 + $0x60] sm:$0xff]
    %v86 = vld [vmem:[#allocation3 + $0x68] sm:$0xff]
    %v87 = vld [vmem:[#allocation3 + $0x70] sm:$0xff]
    %v88 = vld [vmem:[#allocation3 + $0x78] sm:$0xff]
    %v89 = vld [vmem:[#allocation3 + $0x80] sm:$0xff]
    %v90 = vld [vmem:[#allocation3 + $0x88] sm:$0xff]
    %v91 = vld [vmem:[#allocation3 + $0x90] sm:$0xff]
    %v92 = vld [vmem:[#allocation3 + $0x98] sm:$0xff]
    %v93 = vld [vmem:[#allocation3 + $0xa0] sm:$0xff]
    %v94 = vld [vmem:[#allocation3 + $0xa8] sm:$0xff]
    %v95 = vld [vmem:[#allocation3 + $0xb0] sm:$0xff]
    %v96 = vld [vmem:[#allocation3 + $0xb8] sm:$0xff]
    %v97 = vld [vmem:[#allocation3 + $0xc0] sm:$0xff]
    %v98 = vld [vmem:[#allocation3 + $0xc8] sm:$0xff]
    %v99 = vld [vmem:[#allocation3 + $0xd0] sm:$0xff]
    %v100 = vld [vmem:[#allocation3 + $0xd8] sm:$0xff]
    %v101 = vld [vmem:[#allocation3 + $0xe0] sm:$0xff]
    %v102 = vld [vmem:[#allocation3 + $0xe8] sm:$0xff]
    %v103 = vld [vmem:[#allocation3 + $0xf0] sm:$0xff]
    %v104 = vld [vmem:[#allocation3 + $0xf8] sm:$0xff]
    %v105 = vld [vmem:[%s3] sm:$0xf]
    %v107 = vlaneseq
    %v108 = vshrl.u32 %v107, 7
    %v109 = vsub.s32 0, %v108
    %v110 = vrot.slane %v105, %v109
    %v111 = vlaneseq
    %v112 = vshrl.u32 %v111, 7
    %v113 = vsub.s32 1, %v112
    %v114 = vrot.slane %v105, %v113
    %v115 = vlaneseq
    %v116 = vshrl.u32 %v115, 7
    %v117 = vsub.s32 2, %v116
    %v118 = vrot.slane %v105, %v117
    %v119 = vlaneseq
    %v120 = vshrl.u32 %v119, 7
    %v121 = vsub.s32 3, %v120
    %v122 = vrot.slane %v105, %v121
    %v135 = vunpack.c.l.b16 %v65
    %v136 = vunpack.c.l.b16 %v66
    %v137 = vunpack.c.l.b16 %v67
    %v138 = vunpack.c.l.b16 %v68
    %v139 = vunpack.c.l.b16 %v69
    %v140 = vunpack.c.l.b16 %v70
    %v141 = vunpack.c.l.b16 %v71
    %v142 = vunpack.c.l.b16 %v72
    %v143 = vpack.c.b16 %v136, %v135
    %v144 = vpack.c.b16 %v138, %v137
    %v145 = vpack.c.b16 %v140, %v139
    %v146 = vpack.c.b16 %v142, %v141
    %v183 = vunpack.c.l.b16 %v73
    %v184 = vunpack.c.h.b16 %v73
    %v185 = vunpack.c.l.b16 %v74
    %v186 = vunpack.c.h.b16 %v74
    %v187 = vunpack.c.l.b16 %v75
    %v188 = vunpack.c.h.b16 %v75
    %v189 = vunpack.c.l.b16 %v76
    %v190 = vunpack.c.h.b16 %v76
    %v191 = vunpack.c.l.b16 %v77
    %v192 = vunpack.c.h.b16 %v77
    %v193 = vunpack.c.l.b16 %v78
    %v194 = vunpack.c.h.b16 %v78
    %v195 = vunpack.c.l.b16 %v79
    %v196 = vunpack.c.h.b16 %v79
    %v197 = vunpack.c.l.b16 %v80
    %v198 = vunpack.c.h.b16 %v80
    %v199 = vunpack.c.l.b16 %v81
    %v200 = vunpack.c.h.b16 %v81
    %v201 = vunpack.c.l.b16 %v82
    %v202 = vunpack.c.h.b16 %v82
    %v203 = vunpack.c.l.b16 %v83
    %v204 = vunpack.c.h.b16 %v83
    %v205 = vunpack.c.l.b16 %v84
    %v206 = vunpack.c.h.b16 %v84
    %v207 = vunpack.c.l.b16 %v85
    %v208 = vunpack.c.h.b16 %v85
    %v209 = vunpack.c.l.b16 %v86
    %v210 = vunpack.c.h.b16 %v86
    %v211 = vunpack.c.l.b16 %v87
    %v212 = vunpack.c.h.b16 %v87
    %v213 = vunpack.c.l.b16 %v88
    %v214 = vunpack.c.h.b16 %v88
    %v215 = vunpack.c.l.b16 %v89
    %v216 = vunpack.c.h.b16 %v89
    %v217 = vunpack.c.l.b16 %v90
    %v218 = vunpack.c.h.b16 %v90
    %v219 = vunpack.c.l.b16 %v91
    %v220 = vunpack.c.h.b16 %v91
    %v221 = vunpack.c.l.b16 %v92
    %v222 = vunpack.c.h.b16 %v92
    %v223 = vunpack.c.l.b16 %v93
    %v224 = vunpack.c.h.b16 %v93
    %v225 = vunpack.c.l.b16 %v94
    %v226 = vunpack.c.h.b16 %v94
    %v227 = vunpack.c.l.b16 %v95
    %v228 = vunpack.c.h.b16 %v95
    %v229 = vunpack.c.l.b16 %v96
    %v230 = vunpack.c.h.b16 %v96
    %v231 = vunpack.c.l.b16 %v97
    %v232 = vunpack.c.h.b16 %v97
    %v233 = vunpack.c.l.b16 %v98
    %v234 = vunpack.c.h.b16 %v98
    %v235 = vunpack.c.l.b16 %v99
    %v236 = vunpack.c.h.b16 %v99
    %v237 = vunpack.c.l.b16 %v100
    %v238 = vunpack.c.h.b16 %v100
    %v239 = vunpack.c.l.b16 %v101
    %v240 = vunpack.c.h.b16 %v101
    %v241 = vunpack.c.l.b16 %v102
    %v242 = vunpack.c.h.b16 %v102
    %v243 = vunpack.c.l.b16 %v103
    %v244 = vunpack.c.h.b16 %v103
    %v245 = vunpack.c.l.b16 %v104
    %v246 = vunpack.c.h.b16 %v104
    %v247 = vpack.c.b16 %v187, %v183
    %v248 = vpack.c.b16 %v188, %v184
    %v249 = vpack.c.b16 %v189, %v185
    %v250 = vpack.c.b16 %v190, %v186
    %v251 = vpack.c.b16 %v195, %v191
    %v252 = vpack.c.b16 %v196, %v192
    %v253 = vpack.c.b16 %v197, %v193
    %v254 = vpack.c.b16 %v198, %v194
    %v255 = vpack.c.b16 %v203, %v199
    %v256 = vpack.c.b16 %v204, %v200
    %v257 = vpack.c.b16 %v205, %v201
    %v258 = vpack.c.b16 %v206, %v202
    %v259 = vpack.c.b16 %v211, %v207
    %v260 = vpack.c.b16 %v212, %v208
    %v261 = vpack.c.b16 %v213, %v209
    %v262 = vpack.c.b16 %v214, %v210
    %v263 = vpack.c.b16 %v219, %v215
    %v264 = vpack.c.b16 %v220, %v216
    %v265 = vpack.c.b16 %v221, %v217
    %v266 = vpack.c.b16 %v222, %v218
    %v267 = vpack.c.b16 %v227, %v223
    %v268 = vpack.c.b16 %v228, %v224
    %v269 = vpack.c.b16 %v229, %v225
    %v270 = vpack.c.b16 %v230, %v226
    %v271 = vpack.c.b16 %v235, %v231
    %v272 = vpack.c.b16 %v236, %v232
    %v273 = vpack.c.b16 %v237, %v233
    %v274 = vpack.c.b16 %v238, %v234
    %v275 = vpack.c.b16 %v243, %v239
    %v276 = vpack.c.b16 %v244, %v240
    %v277 = vpack.c.b16 %v245, %v241
    %v278 = vpack.c.b16 %v246, %v242
    %311 = vmatprep.subr.bf16.mxu0 %v276
    %312 = vmatpush1.bf16.msra.mxu0 %v275
    %313 = vmatprep.subr.bf16.mxu0 %v272
    %314 = vmatpush1.bf16.msra.mxu0 %v271
    %315 = vmatprep.subr.bf16.mxu0 %v268
    %316 = vmatpush1.bf16.msra.mxu0 %v267
    %317 = vmatprep.subr.bf16.mxu0 %v264
    %318 = vmatpush1.bf16.msra.mxu0 %v263
    %319 = vmatprep.subr.bf16.mxu0 %v260
    %320 = vmatpush1.bf16.msra.mxu0 %v259
    %321 = vmatprep.subr.bf16.mxu0 %v256
    %322 = vmatpush1.bf16.msra.mxu0 %v255
    %323 = vmatprep.subr.bf16.mxu0 %v252
    %324 = vmatpush1.bf16.msra.mxu0 %v251
    %325 = vmatprep.subr.bf16.mxu0 %v248
    %326 = vmatpush1.bf16.msra.mxu0 %v247
    %327 = vmatprep.subr.bf16.mxu0 0
    %328 = vmatpush2.bf16.msra.mxu0 0
    %329 = vmatprep.subr.bf16.mxu0 0
    %330 = vmatpush2.bf16.msra.mxu0 0
    %331 = vmatprep.subr.bf16.mxu0 0
    %332 = vmatpush2.bf16.msra.mxu0 0
    %333 = vmatprep.subr.bf16.mxu0 0
    %334 = vmatpush2.bf16.msra.mxu0 0
    %335 = vmatprep.subr.bf16.mxu0 0
    %336 = vmatpush2.bf16.msra.mxu0 0
    %337 = vmatprep.subr.bf16.mxu0 0
    %338 = vmatpush2.bf16.msra.mxu0 0
    %339 = vmatprep.subr.bf16.mxu0 0
    %340 = vmatpush2.bf16.msra.mxu0 0
    %341 = vmatprep.subr.bf16.mxu0 0
    %342 = vmatpush2.bf16.msra.mxu0 0
    %343 = vmatprep.mubr.bf16.mxu0 0
    %344 = vmatmul.mubr.bf16.gmra.mxu0 %v143
    %v345 = vpop.f32.mrf.mxu0
    %v346 = vadd.f32 %v110, %v345
    %v347 = vpop.f32.mrf.mxu0
    %v348 = vadd.f32 %v114, %v347
    %v349 = vpop.f32.mrf.mxu0
    %v350 = vadd.f32 %v110, %v349
    %v351 = vpop.f32.mrf.mxu0
    %v352 = vadd.f32 %v114, %v351
    %353 = vmatprep.mubr.bf16.mxu0 0
    %354 = vmatmul.mubr.bf16.gmra.mxu0 %v144
    %v355 = vpop.f32.mrf.mxu0
    %v356 = vadd.f32 %v110, %v355
    %v357 = vpop.f32.mrf.mxu0
    %v358 = vadd.f32 %v114, %v357
    %v359 = vpop.f32.mrf.mxu0
    %v360 = vadd.f32 %v110, %v359
    %v361 = vpop.f32.mrf.mxu0
    %v362 = vadd.f32 %v114, %v361
    %363 = vmatprep.mubr.bf16.mxu0 0
    %364 = vmatmul.mubr.bf16.gmra.mxu0 %v145
    %v365 = vpop.f32.mrf.mxu0
    %v366 = vadd.f32 %v110, %v365
    %v367 = vpop.f32.mrf.mxu0
    %v368 = vadd.f32 %v114, %v367
    %v369 = vpop.f32.mrf.mxu0
    %v370 = vadd.f32 %v110, %v369
    %v371 = vpop.f32.mrf.mxu0
    %v372 = vadd.f32 %v114, %v371
    %373 = vmatprep.mubr.bf16.mxu0 0
    %374 = vmatmul.mubr.bf16.gmra.mxu0 %v146
    %v375 = vpop.f32.mrf.mxu0
    %v376 = vadd.f32 %v110, %v375
    %v377 = vpop.f32.mrf.mxu0
    %v378 = vadd.f32 %v114, %v377
    %v379 = vpop.f32.mrf.mxu0
    %v380 = vadd.f32 %v110, %v379
    %v381 = vpop.f32.mrf.mxu0
    %v382 = vadd.f32 %v114, %v381
    %383 = vdwg.mxu0
    %384 = vmatprep.subr.bf16.mxu0 %v278
    %385 = vmatpush1.bf16.msra.mxu0 %v277
    %386 = vmatprep.subr.bf16.mxu0 %v274
    %387 = vmatpush1.bf16.msra.mxu0 %v273
    %388 = vmatprep.subr.bf16.mxu0 %v270
    %389 = vmatpush1.bf16.msra.mxu0 %v269
    %390 = vmatprep.subr.bf16.mxu0 %v266
    %391 = vmatpush1.bf16.msra.mxu0 %v265
    %392 = vmatprep.subr.bf16.mxu0 %v262
    %393 = vmatpush1.bf16.msra.mxu0 %v261
    %394 = vmatprep.subr.bf16.mxu0 %v258
    %395 = vmatpush1.bf16.msra.mxu0 %v257
    %396 = vmatprep.subr.bf16.mxu0 %v254
    %397 = vmatpush1.bf16.msra.mxu0 %v253
    %398 = vmatprep.subr.bf16.mxu0 %v250
    %399 = vmatpush1.bf16.msra.mxu0 %v249
    %400 = vmatprep.subr.bf16.mxu0 0
    %401 = vmatpush2.bf16.msra.mxu0 0
    %402 = vmatprep.subr.bf16.mxu0 0
    %403 = vmatpush2.bf16.msra.mxu0 0
    %404 = vmatprep.subr.bf16.mxu0 0
    %405 = vmatpush2.bf16.msra.mxu0 0
    %406 = vmatprep.subr.bf16.mxu0 0
    %407 = vmatpush2.bf16.msra.mxu0 0
    %408 = vmatprep.subr.bf16.mxu0 0
    %409 = vmatpush2.bf16.msra.mxu0 0
    %410 = vmatprep.subr.bf16.mxu0 0
    %411 = vmatpush2.bf16.msra.mxu0 0
    %412 = vmatprep.subr.bf16.mxu0 0
    %413 = vmatpush2.bf16.msra.mxu0 0
    %414 = vmatprep.subr.bf16.mxu0 0
    %415 = vmatpush2.bf16.msra.mxu0 0
    %416 = vmatprep.mubr.bf16.mxu0 0
    %417 = vmatmul.mubr.bf16.gmra.mxu0 %v143
    %v418 = vpop.f32.mrf.mxu0
    %v419 = vadd.f32 %v118, %v418
    %v420 = vpop.f32.mrf.mxu0
    %v421 = vadd.f32 %v122, %v420
    %v422 = vpop.f32.mrf.mxu0
    %v423 = vadd.f32 %v118, %v422
    %v424 = vpop.f32.mrf.mxu0
    %v425 = vadd.f32 %v122, %v424
    %426 = vmatprep.mubr.bf16.mxu0 0
    %427 = vmatmul.mubr.bf16.gmra.mxu0 %v144
    %v428 = vpop.f32.mrf.mxu0
    %v429 = vadd.f32 %v118, %v428
    %v430 = vpop.f32.mrf.mxu0
    %v431 = vadd.f32 %v122, %v430
    %v432 = vpop.f32.mrf.mxu0
    %v433 = vadd.f32 %v118, %v432
    %v434 = vpop.f32.mrf.mxu0
    %v435 = vadd.f32 %v122, %v434
    %436 = vmatprep.mubr.bf16.mxu0 0
    %437 = vmatmul.mubr.bf16.gmra.mxu0 %v145
    %v438 = vpop.f32.mrf.mxu0
    %v439 = vadd.f32 %v118, %v438
    %v440 = vpop.f32.mrf.mxu0
    %v441 = vadd.f32 %v122, %v440
    %v442 = vpop.f32.mrf.mxu0
    %v443 = vadd.f32 %v118, %v442
    %v444 = vpop.f32.mrf.mxu0
    %v445 = vadd.f32 %v122, %v444
    %446 = vmatprep.mubr.bf16.mxu0 0
    %447 = vmatmul.mubr.bf16.gmra.mxu0 %v146
    %v448 = vpop.f32.mrf.mxu0
    %v449 = vadd.f32 %v118, %v448
    %v450 = vpop.f32.mrf.mxu0
    %v451 = vadd.f32 %v122, %v450
    %v452 = vpop.f32.mrf.mxu0
    %v453 = vadd.f32 %v118, %v452
    %v454 = vpop.f32.mrf.mxu0
    %v455 = vadd.f32 %v122, %v454
    %456 = vdwg.mxu0
    %457 = vst [vmem:[#allocation2] sm:$0xff] %v346
    %458 = vst [vmem:[#allocation2 + $0x8] sm:$0xff] %v348
    %459 = vst [vmem:[#allocation2 + $0x10] sm:$0xff] %v419
    %460 = vst [vmem:[#allocation2 + $0x18] sm:$0xff] %v421
    %461 = vst [vmem:[#allocation2 + $0x20] sm:$0xff] %v350
    %462 = vst [vmem:[#allocation2 + $0x28] sm:$0xff] %v352
    %463 = vst [vmem:[#allocation2 + $0x30] sm:$0xff] %v423
    %464 = vst [vmem:[#allocation2 + $0x38] sm:$0xff] %v425
    %465 = vst [vmem:[#allocation2 + $0x40] sm:$0xff] %v356
    %466 = vst [vmem:[#allocation2 + $0x48] sm:$0xff] %v358
    %467 = vst [vmem:[#allocation2 + $0x50] sm:$0xff] %v429
    %468 = vst [vmem:[#allocation2 + $0x58] sm:$0xff] %v431
    %469 = vst [vmem:[#allocation2 + $0x60] sm:$0xff] %v360
    %470 = vst [vmem:[#allocation2 + $0x68] sm:$0xff] %v362
    %471 = vst [vmem:[#allocation2 + $0x70] sm:$0xff] %v433
    %472 = vst [vmem:[#allocation2 + $0x78] sm:$0xff] %v435
    %473 = vst [vmem:[#allocation2 + $0x80] sm:$0xff] %v366
    %474 = vst [vmem:[#allocation2 + $0x88] sm:$0xff] %v368
    %475 = vst [vmem:[#allocation2 + $0x90] sm:$0xff] %v439
    %476 = vst [vmem:[#allocation2 + $0x98] sm:$0xff] %v441
    %477 = vst [vmem:[#allocation2 + $0xa0] sm:$0xff] %v370
    %478 = vst [vmem:[#allocation2 + $0xa8] sm:$0xff] %v372
    %479 = vst [vmem:[#allocation2 + $0xb0] sm:$0xff] %v443
    %480 = vst [vmem:[#allocation2 + $0xb8] sm:$0xff] %v445
    %481 = vst [vmem:[#allocation2 + $0xc0] sm:$0xff] %v376
    %482 = vst [vmem:[#allocation2 + $0xc8] sm:$0xff] %v378
    %483 = vst [vmem:[#allocation2 + $0xd0] sm:$0xff] %v449
    %484 = vst [vmem:[#allocation2 + $0xd8] sm:$0xff] %v451
    %485 = vst [vmem:[#allocation2 + $0xe0] sm:$0xff] %v380
    %486 = vst [vmem:[#allocation2 + $0xe8] sm:$0xff] %v382
    %487 = vst [vmem:[#allocation2 + $0xf0] sm:$0xff] %v453
    %488 = vst [vmem:[#allocation2 + $0xf8] sm:$0xff] %v455
    %v489 = vld [vmem:[#allocation2] sm:$0xff]
    %v490 = vld [vmem:[#allocation2 + $0x8] sm:$0xff]
    %v491 = vld [vmem:[#allocation2 + $0x10] sm:$0xff]
    %v492 = vld [vmem:[#allocation2 + $0x18] sm:$0xff]
    %v493 = vmul.f32 %v489, 0.5
    %v494 = vmul.f32 %v490, 0.5
    %v495 = vmul.f32 %v491, 0.5
    %v496 = vtanh.pop %v493
    %v497 = vtanh.pop %v494
    %v498 = vtanh.pop %v495
    %v499 = vmul.f32 %v496, 0.5
    %v500 = vmul.f32 %v497, 0.5
    %v501 = vmul.f32 %v498, 0.5
    %v502 = vadd.f32 %v499, 0.5
    %v503 = vadd.f32 %v500, 0.5
    %v504 = vadd.f32 %v501, 0.5
    %v505 = vtanh.pop %v492
    %v506 = vmul.f32 %v503, 0.0
    %v507 = vmul.f32 %v502, %v505
    %v508 = vadd.f32 %v506, %v507
    %v509 = vtanh.pop %v508
    %v510 = vmul.f32 %v504, %v509
    %v511 = vld [vmem:[#allocation2 + $0x20] sm:$0xff]
    %v512 = vld [vmem:[#allocation2 + $0x28] sm:$0xff]
    %v513 = vld [vmem:[#allocation2 + $0x30] sm:$0xff]
    %v514 = vld [vmem:[#allocation2 + $0x38] sm:$0xff]
    %v515 = vpack.c.bf16 %v510, %v510
    %v516 = vld [vmem:[#allocation5] sm:$0xff]
    %v517 = vld [vmem:[#allocation5 + $0x8] sm:$0xff]
    %v518 = vld [vmem:[#allocation5 + $0x10] sm:$0xff]
    %v519 = vld [vmem:[#allocation5 + $0x18] sm:$0xff]
    %v520 = vld [vmem:[#allocation5 + $0x20] sm:$0xff]
    %v521 = vld [vmem:[#allocation5 + $0x28] sm:$0xff]
    %v522 = vld [vmem:[#allocation5 + $0x30] sm:$0xff]
    %v523 = vld [vmem:[#allocation5 + $0x38] sm:$0xff]
    %v524 = vld [vmem:[#allocation5 + $0x40] sm:$0xff]
    %v525 = vld [vmem:[#allocation5 + $0x48] sm:$0xff]
    %v526 = vld [vmem:[#allocation5 + $0x50] sm:$0xff]
    %v527 = vld [vmem:[#allocation5 + $0x58] sm:$0xff]
    %v528 = vld [vmem:[#allocation5 + $0x60] sm:$0xff]
    %v529 = vld [vmem:[#allocation5 + $0x68] sm:$0xff]
    %v530 = vld [vmem:[#allocation5 + $0x70] sm:$0xff]
    %v531 = vld [vmem:[#allocation5 + $0x78] sm:$0xff]
    %v532 = vld [vmem:[#allocation5 + $0x80] sm:$0xff]
    %v533 = vld [vmem:[#allocation5 + $0x88] sm:$0xff]
    %v534 = vld [vmem:[#allocation5 + $0x90] sm:$0xff]
    %v535 = vld [vmem:[#allocation5 + $0x98] sm:$0xff]
    %v536 = vld [vmem:[#allocation5 + $0xa0] sm:$0xff]
    %v537 = vld [vmem:[#allocation5 + $0xa8] sm:$0xff]
    %v538 = vld [vmem:[#allocation5 + $0xb0] sm:$0xff]
    %v539 = vld [vmem:[#allocation5 + $0xb8] sm:$0xff]
    %v540 = vld [vmem:[#allocation5 + $0xc0] sm:$0xff]
    %v541 = vld [vmem:[#allocation5 + $0xc8] sm:$0xff]
    %v542 = vld [vmem:[#allocation5 + $0xd0] sm:$0xff]
    %v543 = vld [vmem:[#allocation5 + $0xd8] sm:$0xff]
    %v544 = vld [vmem:[#allocation5 + $0xe0] sm:$0xff]
    %v545 = vld [vmem:[#allocation5 + $0xe8] sm:$0xff]
    %v546 = vld [vmem:[#allocation5 + $0xf0] sm:$0xff]
    %v547 = vld [vmem:[#allocation5 + $0xf8] sm:$0xff]
    %v580 = vunpack.c.l.b16 %v516
    %v581 = vunpack.c.h.b16 %v516
    %v582 = vunpack.c.l.b16 %v517
    %v583 = vunpack.c.h.b16 %v517
    %v584 = vunpack.c.l.b16 %v518
    %v585 = vunpack.c.h.b16 %v518
    %v586 = vunpack.c.l.b16 %v519
    %v587 = vunpack.c.h.b16 %v519
    %v588 = vunpack.c.l.b16 %v520
    %v589 = vunpack.c.h.b16 %v520
    %v590 = vunpack.c.l.b16 %v521
    %v591 = vunpack.c.h.b16 %v521
    %v592 = vunpack.c.l.b16 %v522
    %v593 = vunpack.c.h.b16 %v522
    %v594 = vunpack.c.l.b16 %v523
    %v595 = vunpack.c.h.b16 %v523
    %v596 = vunpack.c.l.b16 %v524
    %v597 = vunpack.c.h.b16 %v524
    %v598 = vunpack.c.l.b16 %v525
    %v599 = vunpack.c.h.b16 %v525
    %v600 = vunpack.c.l.b16 %v526
    %v601 = vunpack.c.h.b16 %v526
    %v602 = vunpack.c.l.b16 %v527
    %v603 = vunpack.c.h.b16 %v527
    %v604 = vunpack.c.l.b16 %v528
    %v605 = vunpack.c.h.b16 %v528
    %v606 = vunpack.c.l.b16 %v529
    %v607 = vunpack.c.h.b16 %v529
    %v608 = vunpack.c.l.b16 %v530
    %v609 = vunpack.c.h.b16 %v530
    %v610 = vunpack.c.l.b16 %v531
    %v611 = vunpack.c.h.b16 %v531
    %v612 = vunpack.c.l.b16 %v532
    %v613 = vunpack.c.h.b16 %v532
    %v614 = vunpack.c.l.b16 %v533
    %v615 = vunpack.c.h.b16 %v533
    %v616 = vunpack.c.l.b16 %v534
    %v617 = vunpack.c.h.b16 %v534
    %v618 = vunpack.c.l.b16 %v535
    %v619 = vunpack.c.h.b16 %v535
    %v620 = vunpack.c.l.b16 %v536
    %v621 = vunpack.c.h.b16 %v536
    %v622 = vunpack.c.l.b16 %v537
    %v623 = vunpack.c.h.b16 %v537
    %v624 = vunpack.c.l.b16 %v538
    %v625 = vunpack.c.h.b16 %v538
    %v626 = vunpack.c.l.b16 %v539
    %v627 = vunpack.c.h.b16 %v539
    %v628 = vunpack.c.l.b16 %v540
    %v629 = vunpack.c.h.b16 %v540
    %v630 = vunpack.c.l.b16 %v541
    %v631 = vunpack.c.h.b16 %v541
    %v632 = vunpack.c.l.b16 %v542
    %v633 = vunpack.c.h.b16 %v542
    %v634 = vunpack.c.l.b16 %v543
    %v635 = vunpack.c.h.b16 %v543
    %v636 = vunpack.c.l.b16 %v544
    %v637 = vunpack.c.h.b16 %v544
    %v638 = vunpack.c.l.b16 %v545
    %v639 = vunpack.c.h.b16 %v545
    %v640 = vunpack.c.l.b16 %v546
    %v641 = vunpack.c.h.b16 %v546
    %v642 = vunpack.c.l.b16 %v547
    %v643 = vunpack.c.h.b16 %v547
    %v644 = vpack.c.b16 %v584, %v580
    %v645 = vpack.c.b16 %v585, %v581
    %v646 = vpack.c.b16 %v586, %v582
    %v647 = vpack.c.b16 %v587, %v583
    %v648 = vpack.c.b16 %v592, %v588
    %v649 = vpack.c.b16 %v593, %v589
    %v650 = vpack.c.b16 %v594, %v590
    %v651 = vpack.c.b16 %v595, %v591
    %v652 = vpack.c.b16 %v600, %v596
    %v653 = vpack.c.b16 %v601, %v597
    %v654 = vpack.c.b16 %v602, %v598
    %v655 = vpack.c.b16 %v603, %v599
    %v656 = vpack.c.b16 %v608, %v604
    %v657 = vpack.c.b16 %v609, %v605
    %v658 = vpack.c.b16 %v610, %v606
    %v659 = vpack.c.b16 %v611, %v607
    %v660 = vpack.c.b16 %v616, %v612
    %v661 = vpack.c.b16 %v617, %v613
    %v662 = vpack.c.b16 %v618, %v614
    %v663 = vpack.c.b16 %v619, %v615
    %v664 = vpack.c.b16 %v624, %v620
    %v665 = vpack.c.b16 %v625, %v621
    %v666 = vpack.c.b16 %v626, %v622
    %v667 = vpack.c.b16 %v627, %v623
    %v668 = vpack.c.b16 %v632, %v628
    %v669 = vpack.c.b16 %v633, %v629
    %v670 = vpack.c.b16 %v634, %v630
    %v671 = vpack.c.b16 %v635, %v631
    %v672 = vpack.c.b16 %v640, %v636
    %v673 = vpack.c.b16 %v641, %v637
    %v674 = vpack.c.b16 %v642, %v638
    %v675 = vpack.c.b16 %v643, %v639
    %708 = vmatprep.subr.bf16.mxu0 %v673
    %709 = vmatpush1.bf16.msra.mxu0 %v672
    %710 = vmatprep.subr.bf16.mxu0 %v669
    %711 = vmatpush1.bf16.msra.mxu0 %v668
    %712 = vmatprep.subr.bf16.mxu0 %v665
    %713 = vmatpush1.bf16.msra.mxu0 %v664
    %714 = vmatprep.subr.bf16.mxu0 %v661
    %715 = vmatpush1.bf16.msra.mxu0 %v660
    %716 = vmatprep.subr.bf16.mxu0 %v657
    %717 = vmatpush1.bf16.msra.mxu0 %v656
    %718 = vmatprep.subr.bf16.mxu0 %v653
    %719 = vmatpush1.bf16.msra.mxu0 %v652
    %720 = vmatprep.subr.bf16.mxu0 %v649
    %721 = vmatpush1.bf16.msra.mxu0 %v648
    %722 = vmatprep.subr.bf16.mxu0 %v645
    %723 = vmatpush1.bf16.msra.mxu0 %v644
    %724 = vmatprep.subr.bf16.mxu0 0
    %725 = vmatpush2.bf16.msra.mxu0 0
    %726 = vmatprep.subr.bf16.mxu0 0
    %727 = vmatpush2.bf16.msra.mxu0 0
    %728 = vmatprep.subr.bf16.mxu0 0
    %729 = vmatpush2.bf16.msra.mxu0 0
    %730 = vmatprep.subr.bf16.mxu0 0
    %731 = vmatpush2.bf16.msra.mxu0 0
    %732 = vmatprep.subr.bf16.mxu0 0
    %733 = vmatpush2.bf16.msra.mxu0 0
    %734 = vmatprep.subr.bf16.mxu0 0
    %735 = vmatpush2.bf16.msra.mxu0 0
    %736 = vmatprep.subr.bf16.mxu0 0
    %737 = vmatpush2.bf16.msra.mxu0 0
    %738 = vmatprep.subr.bf16.mxu0 0
    %739 = vmatpush2.bf16.msra.mxu0 0
    %740 = vmatprep.mubr.bf16.mxu0 0
    %741 = vmatmul.mubr.bf16.gmra.mxu0 %v515
    %v742 = vpop.f32.mrf.mxu0
    %v743 = vadd.f32 0.0, %v742
    %v744 = vpop.f32.mrf.mxu0
    %v745 = vadd.f32 0.0, %v744
    %v746 = vpop.f32.mrf.mxu0
    %v747 = vpop.f32.mrf.mxu0
    %748 = vdwg.mxu0
    %749 = vmatprep.subr.bf16.mxu0 %v675
    %750 = vmatpush1.bf16.msra.mxu0 %v674
    %751 = vmatprep.subr.bf16.mxu0 %v671
    %752 = vmatpush1.bf16.msra.mxu0 %v670
    %753 = vmatprep.subr.bf16.mxu0 %v667
    %754 = vmatpush1.bf16.msra.mxu0 %v666
    %755 = vmatprep.subr.bf16.mxu0 %v663
    %756 = vmatpush1.bf16.msra.mxu0 %v662
    %757 = vmatprep.subr.bf16.mxu0 %v659
    %758 = vmatpush1.bf16.msra.mxu0 %v658
    %759 = vmatprep.subr.bf16.mxu0 %v655
    %760 = vmatpush1.bf16.msra.mxu0 %v654
    %761 = vmatprep.subr.bf16.mxu0 %v651
    %762 = vmatpush1.bf16.msra.mxu0 %v650
    %763 = vmatprep.subr.bf16.mxu0 %v647
    %764 = vmatpush1.bf16.msra.mxu0 %v646
    %765 = vmatprep.subr.bf16.mxu0 0
    %766 = vmatpush2.bf16.msra.mxu0 0
    %767 = vmatprep.subr.bf16.mxu0 0
    %768 = vmatpush2.bf16.msra.mxu0 0
    %769 = vmatprep.subr.bf16.mxu0 0
    %770 = vmatpush2.bf16.msra.mxu0 0
    %771 = vmatprep.subr.bf16.mxu0 0
    %772 = vmatpush2.bf16.msra.mxu0 0
    %773 = vmatprep.subr.bf16.mxu0 0
    %774 = vmatpush2.bf16.msra.mxu0 0
    %775 = vmatprep.subr.bf16.mxu0 0
    %776 = vmatpush2.bf16.msra.mxu0 0
    %777 = vmatprep.subr.bf16.mxu0 0
    %778 = vmatpush2.bf16.msra.mxu0 0
    %779 = vmatprep.subr.bf16.mxu0 0
    %780 = vmatpush2.bf16.msra.mxu0 0
    %781 = vmatprep.mubr.bf16.mxu0 0
    %782 = vmatmul.mubr.bf16.gmra.mxu0 %v515
    %v783 = vpop.f32.mrf.mxu0
    %v784 = vadd.f32 0.0, %v783
    %v785 = vpop.f32.mrf.mxu0
    %v786 = vadd.f32 0.0, %v785
    %v787 = vpop.f32.mrf.mxu0
    %v788 = vpop.f32.mrf.mxu0
    %789 = vdwg.mxu0
    %v790 = vadd.f32 %v511, %v743
    %v791 = vadd.f32 %v512, %v745
    %v792 = vadd.f32 %v513, %v784
    %v793 = vadd.f32 %v514, %v786
    %v794 = vmul.f32 %v790, 0.5
    %v795 = vmul.f32 %v791, 0.5
    %v796 = vmul.f32 %v792, 0.5
    %v797 = vtanh.pop %v794
    %v798 = vtanh.pop %v795
    %v799 = vtanh.pop %v796
    %v800 = vmul.f32 %v797, 0.5
    %v801 = vmul.f32 %v798, 0.5
    %v802 = vmul.f32 %v799, 0.5
    %v803 = vadd.f32 %v800, 0.5
    %v804 = vadd.f32 %v801, 0.5
    %v805 = vadd.f32 %v802, 0.5
    %v806 = vtanh.pop %v793
    %v807 = vmul.f32 %v804, %v508
    %v808 = vmul.f32 %v803, %v806
    %v809 = vadd.f32 %v807, %v808
    %v810 = vtanh.pop %v809
    %v811 = vmul.f32 %v805, %v810
    %v812 = vld [vmem:[#allocation2 + $0x40] sm:$0xff]
    %v813 = vld [vmem:[#allocation2 + $0x48] sm:$0xff]
    %v814 = vld [vmem:[#allocation2 + $0x50] sm:$0xff]
    %v815 = vld [vmem:[#allocation2 + $0x58] sm:$0xff]
    %v816 = vpack.c.bf16 %v811, %v811
    %817 = vmatprep.subr.bf16.mxu0 %v673
    %818 = vmatpush1.bf16.msra.mxu0 %v672
    %819 = vmatprep.subr.bf16.mxu0 %v669
    %820 = vmatpush1.bf16.msra.mxu0 %v668
    %821 = vmatprep.subr.bf16.mxu0 %v665
    %822 = vmatpush1.bf16.msra.mxu0 %v664
    %823 = vmatprep.subr.bf16.mxu0 %v661
    %824 = vmatpush1.bf16.msra.mxu0 %v660
    %825 = vmatprep.subr.bf16.mxu0 %v657
    %826 = vmatpush1.bf16.msra.mxu0 %v656
    %827 = vmatprep.subr.bf16.mxu0 %v653
    %828 = vmatpush1.bf16.msra.mxu0 %v652
    %829 = vmatprep.subr.bf16.mxu0 %v649
    %830 = vmatpush1.bf16.msra.mxu0 %v648
    %831 = vmatprep.subr.bf16.mxu0 %v645
    %832 = vmatpush1.bf16.msra.mxu0 %v644
    %833 = vmatprep.subr.bf16.mxu0 0
    %834 = vmatpush2.bf16.msra.mxu0 0
    %835 = vmatprep.subr.bf16.mxu0 0
    %836 = vmatpush2.bf16.msra.mxu0 0
    %837 = vmatprep.subr.bf16.mxu0 0
    %838 = vmatpush2.bf16.msra.mxu0 0
    %839 = vmatprep.subr.bf16.mxu0 0
    %840 = vmatpush2.bf16.msra.mxu0 0
    %841 = vmatprep.subr.bf16.mxu0 0
    %842 = vmatpush2.bf16.msra.mxu0 0
    %843 = vmatprep.subr.bf16.mxu0 0
    %844 = vmatpush2.bf16.msra.mxu0 0
    %845 = vmatprep.subr.bf16.mxu0 0
    %846 = vmatpush2.bf16.msra.mxu0 0
    %847 = vmatprep.subr.bf16.mxu0 0
    %848 = vmatpush2.bf16.msra.mxu0 0
    %849 = vmatprep.mubr.bf16.mxu0 0
    %850 = vmatmul.mubr.bf16.gmra.mxu0 %v816
    %v851 = vpop.f32.mrf.mxu0
    %v852 = vadd.f32 0.0, %v851
    %v853 = vpop.f32.mrf.mxu0
    %v854 = vadd.f32 0.0, %v853
    %v855 = vpop.f32.mrf.mxu0
    %v856 = vpop.f32.mrf.mxu0
    %857 = vdwg.mxu0
    %858 = vmatprep.subr.bf16.mxu0 %v675
    %859 = vmatpush1.bf16.msra.mxu0 %v674
    %860 = vmatprep.subr.bf16.mxu0 %v671
    %861 = vmatpush1.bf16.msra.mxu0 %v670
    %862 = vmatprep.subr.bf16.mxu0 %v667
    %863 = vmatpush1.bf16.msra.mxu0 %v666
    %864 = vmatprep.subr.bf16.mxu0 %v663
    %865 = vmatpush1.bf16.msra.mxu0 %v662
    %866 = vmatprep.subr.bf16.mxu0 %v659
    %867 = vmatpush1.bf16.msra.mxu0 %v658
    %868 = vmatprep.subr.bf16.mxu0 %v655
    %869 = vmatpush1.bf16.msra.mxu0 %v654
    %870 = vmatprep.subr.bf16.mxu0 %v651
    %871 = vmatpush1.bf16.msra.mxu0 %v650
    %872 = vmatprep.subr.bf16.mxu0 %v647
    %873 = vmatpush1.bf16.msra.mxu0 %v646
    %874 = vmatprep.subr.bf16.mxu0 0
    %875 = vmatpush2.bf16.msra.mxu0 0
    %876 = vmatprep.subr.bf16.mxu0 0
    %877 = vmatpush2.bf16.msra.mxu0 0
    %878 = vmatprep.subr.bf16.mxu0 0
    %879 = vmatpush2.bf16.msra.mxu0 0
    %880 = vmatprep.subr.bf16.mxu0 0
    %881 = vmatpush2.bf16.msra.mxu0 0
    %882 = vmatprep.subr.bf16.mxu0 0
    %883 = vmatpush2.bf16.msra.mxu0 0
    %884 = vmatprep.subr.bf16.mxu0 0
    %885 = vmatpush2.bf16.msra.mxu0 0
    %886 = vmatprep.subr.bf16.mxu0 0
    %887 = vmatpush2.bf16.msra.mxu0 0
    %888 = vmatprep.subr.bf16.mxu0 0
    %889 = vmatpush2.bf16.msra.mxu0 0
    %890 = vmatprep.mubr.bf16.mxu0 0
    %891 = vmatmul.mubr.bf16.gmra.mxu0 %v816
    %v892 = vpop.f32.mrf.mxu0
    %v893 = vadd.f32 0.0, %v892
    %v894 = vpop.f32.mrf.mxu0
    %v895 = vadd.f32 0.0, %v894
    %v896 = vpop.f32.mrf.mxu0
    %v897 = vpop.f32.mrf.mxu0
    %898 = vdwg.mxu0
    %v899 = vadd.f32 %v812, %v852
    %v900 = vadd.f32 %v813, %v854
    %v901 = vadd.f32 %v814, %v893
    %v902 = vadd.f32 %v815, %v895
    %v903 = vmul.f32 %v899, 0.5
    %v904 = vmul.f32 %v900, 0.5
    %v905 = vmul.f32 %v901, 0.5
    %v906 = vtanh.pop %v903
    %v907 = vtanh.pop %v904
    %v908 = vtanh.pop %v905
    %v909 = vmul.f32 %v906, 0.5
    %v910 = vmul.f32 %v907, 0.5
    %v911 = vmul.f32 %v908, 0.5
    %v912 = vadd.f32 %v909, 0.5
    %v913 = vadd.f32 %v910, 0.5
    %v914 = vadd.f32 %v911, 0.5
    %v915 = vtanh.pop %v902
    %v916 = vmul.f32 %v913, %v809
    %v917 = vmul.f32 %v912, %v915
    %v918 = vadd.f32 %v916, %v917
    %v919 = vtanh.pop %v918
    %v920 = vmul.f32 %v914, %v919
    %v921 = vld [vmem:[#allocation2 + $0x60] sm:$0xff]
    %v922 = vld [vmem:[#allocation2 + $0x68] sm:$0xff]
    %v923 = vld [vmem:[#allocation2 + $0x70] sm:$0xff]
    %v924 = vld [vmem:[#allocation2 + $0x78] sm:$0xff]
    %v925 = vpack.c.bf16 %v920, %v920
    %926 = vmatprep.subr.bf16.mxu0 %v673
    %927 = vmatpush1.bf16.msra.mxu0 %v672
    %928 = vmatprep.subr.bf16.mxu0 %v669
    %929 = vmatpush1.bf16.msra.mxu0 %v668
    %930 = vmatprep.subr.bf16.mxu0 %v665
    %931 = vmatpush1.bf16.msra.mxu0 %v664
    %932 = vmatprep.subr.bf16.mxu0 %v661
    %933 = vmatpush1.bf16.msra.mxu0 %v660
    %934 = vmatprep.subr.bf16.mxu0 %v657
    %935 = vmatpush1.bf16.msra.mxu0 %v656
    %936 = vmatprep.subr.bf16.mxu0 %v653
    %937 = vmatpush1.bf16.msra.mxu0 %v652
    %938 = vmatprep.subr.bf16.mxu0 %v649
    %939 = vmatpush1.bf16.msra.mxu0 %v648
    %940 = vmatprep.subr.bf16.mxu0 %v645
    %941 = vmatpush1.bf16.msra.mxu0 %v644
    %942 = vmatprep.subr.bf16.mxu0 0
    %943 = vmatpush2.bf16.msra.mxu0 0
    %944 = vmatprep.subr.bf16.mxu0 0
    %945 = vmatpush2.bf16.msra.mxu0 0
    %946 = vmatprep.subr.bf16.mxu0 0
    %947 = vmatpush2.bf16.msra.mxu0 0
    %948 = vmatprep.subr.bf16.mxu0 0
    %949 = vmatpush2.bf16.msra.mxu0 0
    %950 = vmatprep.subr.bf16.mxu0 0
    %951 = vmatpush2.bf16.msra.mxu0 0
    %952 = vmatprep.subr.bf16.mxu0 0
    %953 = vmatpush2.bf16.msra.mxu0 0
    %954 = vmatprep.subr.bf16.mxu0 0
    %955 = vmatpush2.bf16.msra.mxu0 0
    %956 = vmatprep.subr.bf16.mxu0 0
    %957 = vmatpush2.bf16.msra.mxu0 0
    %958 = vmatprep.mubr.bf16.mxu0 0
    %959 = vmatmul.mubr.bf16.gmra.mxu0 %v925
    %v960 = vpop.f32.mrf.mxu0
    %v961 = vadd.f32 0.0, %v960
    %v962 = vpop.f32.mrf.mxu0
    %v963 = vadd.f32 0.0, %v962
    %v964 = vpop.f32.mrf.mxu0
    %v965 = vpop.f32.mrf.mxu0
    %966 = vdwg.mxu0
    %967 = vmatprep.subr.bf16.mxu0 %v675
    %968 = vmatpush1.bf16.msra.mxu0 %v674
    %969 = vmatprep.subr.bf16.mxu0 %v671
    %970 = vmatpush1.bf16.msra.mxu0 %v670
    %971 = vmatprep.subr.bf16.mxu0 %v667
    %972 = vmatpush1.bf16.msra.mxu0 %v666
    %973 = vmatprep.subr.bf16.mxu0 %v663
    %974 = vmatpush1.bf16.msra.mxu0 %v662
    %975 = vmatprep.subr.bf16.mxu0 %v659
    %976 = vmatpush1.bf16.msra.mxu0 %v658
    %977 = vmatprep.subr.bf16.mxu0 %v655
    %978 = vmatpush1.bf16.msra.mxu0 %v654
    %979 = vmatprep.subr.bf16.mxu0 %v651
    %980 = vmatpush1.bf16.msra.mxu0 %v650
    %981 = vmatprep.subr.bf16.mxu0 %v647
    %982 = vmatpush1.bf16.msra.mxu0 %v646
    %983 = vmatprep.subr.bf16.mxu0 0
    %984 = vmatpush2.bf16.msra.mxu0 0
    %985 = vmatprep.subr.bf16.mxu0 0
    %986 = vmatpush2.bf16.msra.mxu0 0
    %987 = vmatprep.subr.bf16.mxu0 0
    %988 = vmatpush2.bf16.msra.mxu0 0
    %989 = vmatprep.subr.bf16.mxu0 0
    %990 = vmatpush2.bf16.msra.mxu0 0
    %991 = vmatprep.subr.bf16.mxu0 0
    %992 = vmatpush2.bf16.msra.mxu0 0
    %993 = vmatprep.subr.bf16.mxu0 0
    %994 = vmatpush2.bf16.msra.mxu0 0
    %995 = vmatprep.subr.bf16.mxu0 0
    %996 = vmatpush2.bf16.msra.mxu0 0
    %997 = vmatprep.subr.bf16.mxu0 0
    %998 = vmatpush2.bf16.msra.mxu0 0
    %999 = vmatprep.mubr.bf16.mxu0 0
    %1000 = vmatmul.mubr.bf16.gmra.mxu0 %v925
    %v1001 = vpop.f32.mrf.mxu0
    %v1002 = vadd.f32 0.0, %v1001
    %v1003 = vpop.f32.mrf.mxu0
    %v1004 = vadd.f32 0.0, %v1003
    %v1005 = vpop.f32.mrf.mxu0
    %v1006 = vpop.f32.mrf.mxu0
    %1007 = vdwg.mxu0
    %v1008 = vadd.f32 %v921, %v961
    %v1009 = vadd.f32 %v922, %v963
    %v1010 = vadd.f32 %v923, %v1002
    %v1011 = vadd.f32 %v924, %v1004
    %v1012 = vmul.f32 %v1008, 0.5
    %v1013 = vmul.f32 %v1009, 0.5
    %v1014 = vmul.f32 %v1010, 0.5
    %v1015 = vtanh.pop %v1012
    %v1016 = vtanh.pop %v1013
    %v1017 = vtanh.pop %v1014
    %v1018 = vmul.f32 %v1015, 0.5
    %v1019 = vmul.f32 %v1016, 0.5
    %v1020 = vmul.f32 %v1017, 0.5
    %v1021 = vadd.f32 %v1018, 0.5
    %v1022 = vadd.f32 %v1019, 0.5
    %v1023 = vadd.f32 %v1020, 0.5
    %v1024 = vtanh.pop %v1011
    %v1025 = vmul.f32 %v1022, %v918
    %v1026 = vmul.f32 %v1021, %v1024
    %v1027 = vadd.f32 %v1025, %v1026
    %v1028 = vtanh.pop %v1027
    %v1029 = vmul.f32 %v1023, %v1028
    %v1030 = vld [vmem:[#allocation2 + $0x80] sm:$0xff]
    %v1031 = vld [vmem:[#allocation2 + $0x88] sm:$0xff]
    %v1032 = vld [vmem:[#allocation2 + $0x90] sm:$0xff]
    %v1033 = vld [vmem:[#allocation2 + $0x98] sm:$0xff]
    %v1034 = vpack.c.bf16 %v1029, %v1029
    %1035 = vmatprep.subr.bf16.mxu0 %v673
    %1036 = vmatpush1.bf16.msra.mxu0 %v672
    %1037 = vmatprep.subr.bf16.mxu0 %v669
    %1038 = vmatpush1.bf16.msra.mxu0 %v668
    %1039 = vmatprep.subr.bf16.mxu0 %v665
    %1040 = vmatpush1.bf16.msra.mxu0 %v664
    %1041 = vmatprep.subr.bf16.mxu0 %v661
    %1042 = vmatpush1.bf16.msra.mxu0 %v660
    %1043 = vmatprep.subr.bf16.mxu0 %v657
    %1044 = vmatpush1.bf16.msra.mxu0 %v656
    %1045 = vmatprep.subr.bf16.mxu0 %v653
    %1046 = vmatpush1.bf16.msra.mxu0 %v652
    %1047 = vmatprep.subr.bf16.mxu0 %v649
    %1048 = vmatpush1.bf16.msra.mxu0 %v648
    %1049 = vmatprep.subr.bf16.mxu0 %v645
    %1050 = vmatpush1.bf16.msra.mxu0 %v644
    %1051 = vmatprep.subr.bf16.mxu0 0
    %1052 = vmatpush2.bf16.msra.mxu0 0
    %1053 = vmatprep.subr.bf16.mxu0 0
    %1054 = vmatpush2.bf16.msra.mxu0 0
    %1055 = vmatprep.subr.bf16.mxu0 0
    %1056 = vmatpush2.bf16.msra.mxu0 0
    %1057 = vmatprep.subr.bf16.mxu0 0
    %1058 = vmatpush2.bf16.msra.mxu0 0
    %1059 = vmatprep.subr.bf16.mxu0 0
    %1060 = vmatpush2.bf16.msra.mxu0 0
    %1061 = vmatprep.subr.bf16.mxu0 0
    %1062 = vmatpush2.bf16.msra.mxu0 0
    %1063 = vmatprep.subr.bf16.mxu0 0
    %1064 = vmatpush2.bf16.msra.mxu0 0
    %1065 = vmatprep.subr.bf16.mxu0 0
    %1066 = vmatpush2.bf16.msra.mxu0 0
    %1067 = vmatprep.mubr.bf16.mxu0 0
    %1068 = vmatmul.mubr.bf16.gmra.mxu0 %v1034
    %v1069 = vpop.f32.mrf.mxu0
    %v1070 = vadd.f32 0.0, %v1069
    %v1071 = vpop.f32.mrf.mxu0
    %v1072 = vadd.f32 0.0, %v1071
    %v1073 = vpop.f32.mrf.mxu0
    %v1074 = vpop.f32.mrf.mxu0
    %1075 = vdwg.mxu0
    %1076 = vmatprep.subr.bf16.mxu0 %v675
    %1077 = vmatpush1.bf16.msra.mxu0 %v674
    %1078 = vmatprep.subr.bf16.mxu0 %v671
    %1079 = vmatpush1.bf16.msra.mxu0 %v670
    %1080 = vmatprep.subr.bf16.mxu0 %v667
    %1081 = vmatpush1.bf16.msra.mxu0 %v666
    %1082 = vmatprep.subr.bf16.mxu0 %v663
    %1083 = vmatpush1.bf16.msra.mxu0 %v662
    %1084 = vmatprep.subr.bf16.mxu0 %v659
    %1085 = vmatpush1.bf16.msra.mxu0 %v658
    %1086 = vmatprep.subr.bf16.mxu0 %v655
    %1087 = vmatpush1.bf16.msra.mxu0 %v654
    %1088 = vmatprep.subr.bf16.mxu0 %v651
    %1089 = vmatpush1.bf16.msra.mxu0 %v650
    %1090 = vmatprep.subr.bf16.mxu0 %v647
    %1091 = vmatpush1.bf16.msra.mxu0 %v646
    %1092 = vmatprep.subr.bf16.mxu0 0
    %1093 = vmatpush2.bf16.msra.mxu0 0
    %1094 = vmatprep.subr.bf16.mxu0 0
    %1095 = vmatpush2.bf16.msra.mxu0 0
    %1096 = vmatprep.subr.bf16.mxu0 0
    %1097 = vmatpush2.bf16.msra.mxu0 0
    %1098 = vmatprep.subr.bf16.mxu0 0
    %1099 = vmatpush2.bf16.msra.mxu0 0
    %1100 = vmatprep.subr.bf16.mxu0 0
    %1101 = vmatpush2.bf16.msra.mxu0 0
    %1102 = vmatprep.subr.bf16.mxu0 0
    %1103 = vmatpush2.bf16.msra.mxu0 0
    %1104 = vmatprep.subr.bf16.mxu0 0
    %1105 = vmatpush2.bf16.msra.mxu0 0
    %1106 = vmatprep.subr.bf16.mxu0 0
    %1107 = vmatpush2.bf16.msra.mxu0 0
    %1108 = vmatprep.mubr.bf16.mxu0 0
    %1109 = vmatmul.mubr.bf16.gmra.mxu0 %v1034
    %v1110 = vpop.f32.mrf.mxu0
    %v1111 = vadd.f32 0.0, %v1110
    %v1112 = vpop.f32.mrf.mxu0
    %v1113 = vadd.f32 0.0, %v1112
    %v1114 = vpop.f32.mrf.mxu0
    %v1115 = vpop.f32.mrf.mxu0
    %1116 = vdwg.mxu0
    %v1117 = vadd.f32 %v1030, %v1070
    %v1118 = vadd.f32 %v1031, %v1072
    %v1119 = vadd.f32 %v1032, %v1111
    %v1120 = vadd.f32 %v1033, %v1113
    %v1121 = vmul.f32 %v1117, 0.5
    %v1122 = vmul.f32 %v1118, 0.5
    %v1123 = vmul.f32 %v1119, 0.5
    %v1124 = vtanh.pop %v1121
    %v1125 = vtanh.pop %v1122
    %v1126 = vtanh.pop %v1123
    %v1127 = vmul.f32 %v1124, 0.5
    %v1128 = vmul.f32 %v1125, 0.5
    %v1129 = vmul.f32 %v1126, 0.5
    %v1130 = vadd.f32 %v1127, 0.5
    %v1131 = vadd.f32 %v1128, 0.5
    %v1132 = vadd.f32 %v1129, 0.5
    %v1133 = vtanh.pop %v1120
    %v1134 = vmul.f32 %v1131, %v1027
    %v1135 = vmul.f32 %v1130, %v1133
    %v1136 = vadd.f32 %v1134, %v1135
    %v1137 = vtanh.pop %v1136
    %v1138 = vmul.f32 %v1132, %v1137
    %v1139 = vld [vmem:[#allocation2 + $0xa0] sm:$0xff]
    %v1140 = vld [vmem:[#allocation2 + $0xa8] sm:$0xff]
    %v1141 = vld [vmem:[#allocation2 + $0xb0] sm:$0xff]
    %v1142 = vld [vmem:[#allocation2 + $0xb8] sm:$0xff]
    %v1143 = vpack.c.bf16 %v1138, %v1138
    %1144 = vmatprep.subr.bf16.mxu0 %v673
    %1145 = vmatpush1.bf16.msra.mxu0 %v672
    %1146 = vmatprep.subr.bf16.mxu0 %v669
    %1147 = vmatpush1.bf16.msra.mxu0 %v668
    %1148 = vmatprep.subr.bf16.mxu0 %v665
    %1149 = vmatpush1.bf16.msra.mxu0 %v664
    %1150 = vmatprep.subr.bf16.mxu0 %v661
    %1151 = vmatpush1.bf16.msra.mxu0 %v660
    %1152 = vmatprep.subr.bf16.mxu0 %v657
    %1153 = vmatpush1.bf16.msra.mxu0 %v656
    %1154 = vmatprep.subr.bf16.mxu0 %v653
    %1155 = vmatpush1.bf16.msra.mxu0 %v652
    %1156 = vmatprep.subr.bf16.mxu0 %v649
    %1157 = vmatpush1.bf16.msra.mxu0 %v648
    %1158 = vmatprep.subr.bf16.mxu0 %v645
    %1159 = vmatpush1.bf16.msra.mxu0 %v644
    %1160 = vmatprep.subr.bf16.mxu0 0
    %1161 = vmatpush2.bf16.msra.mxu0 0
    %1162 = vmatprep.subr.bf16.mxu0 0
    %1163 = vmatpush2.bf16.msra.mxu0 0
    %1164 = vmatprep.subr.bf16.mxu0 0
    %1165 = vmatpush2.bf16.msra.mxu0 0
    %1166 = vmatprep.subr.bf16.mxu0 0
    %1167 = vmatpush2.bf16.msra.mxu0 0
    %1168 = vmatprep.subr.bf16.mxu0 0
    %1169 = vmatpush2.bf16.msra.mxu0 0
    %1170 = vmatprep.subr.bf16.mxu0 0
    %1171 = vmatpush2.bf16.msra.mxu0 0
    %1172 = vmatprep.subr.bf16.mxu0 0
    %1173 = vmatpush2.bf16.msra.mxu0 0
    %1174 = vmatprep.subr.bf16.mxu0 0
    %1175 = vmatpush2.bf16.msra.mxu0 0
    %1176 = vmatprep.mubr.bf16.mxu0 0
    %1177 = vmatmul.mubr.bf16.gmra.mxu0 %v1143
    %v1178 = vpop.f32.mrf.mxu0
    %v1179 = vadd.f32 0.0, %v1178
    %v1180 = vpop.f32.mrf.mxu0
    %v1181 = vadd.f32 0.0, %v1180
    %v1182 = vpop.f32.mrf.mxu0
    %v1183 = vpop.f32.mrf.mxu0
    %1184 = vdwg.mxu0
    %1185 = vmatprep.subr.bf16.mxu0 %v675
    %1186 = vmatpush1.bf16.msra.mxu0 %v674
    %1187 = vmatprep.subr.bf16.mxu0 %v671
    %1188 = vmatpush1.bf16.msra.mxu0 %v670
    %1189 = vmatprep.subr.bf16.mxu0 %v667
    %1190 = vmatpush1.bf16.msra.mxu0 %v666
    %1191 = vmatprep.subr.bf16.mxu0 %v663
    %1192 = vmatpush1.bf16.msra.mxu0 %v662
    %1193 = vmatprep.subr.bf16.mxu0 %v659
    %1194 = vmatpush1.bf16.msra.mxu0 %v658
    %1195 = vmatprep.subr.bf16.mxu0 %v655
    %1196 = vmatpush1.bf16.msra.mxu0 %v654
    %1197 = vmatprep.subr.bf16.mxu0 %v651
    %1198 = vmatpush1.bf16.msra.mxu0 %v650
    %1199 = vmatprep.subr.bf16.mxu0 %v647
    %1200 = vmatpush1.bf16.msra.mxu0 %v646
    %1201 = vmatprep.subr.bf16.mxu0 0
    %1202 = vmatpush2.bf16.msra.mxu0 0
    %1203 = vmatprep.subr.bf16.mxu0 0
    %1204 = vmatpush2.bf16.msra.mxu0 0
    %1205 = vmatprep.subr.bf16.mxu0 0
    %1206 = vmatpush2.bf16.msra.mxu0 0
    %1207 = vmatprep.subr.bf16.mxu0 0
    %1208 = vmatpush2.bf16.msra.mxu0 0
    %1209 = vmatprep.subr.bf16.mxu0 0
    %1210 = vmatpush2.bf16.msra.mxu0 0
    %1211 = vmatprep.subr.bf16.mxu0 0
    %1212 = vmatpush2.bf16.msra.mxu0 0
    %1213 = vmatprep.subr.bf16.mxu0 0
    %1214 = vmatpush2.bf16.msra.mxu0 0
    %1215 = vmatprep.subr.bf16.mxu0 0
    %1216 = vmatpush2.bf16.msra.mxu0 0
    %1217 = vmatprep.mubr.bf16.mxu0 0
    %1218 = vmatmul.mubr.bf16.gmra.mxu0 %v1143
    %v1219 = vpop.f32.mrf.mxu0
    %v1220 = vadd.f32 0.0, %v1219
    %v1221 = vpop.f32.mrf.mxu0
    %v1222 = vadd.f32 0.0, %v1221
    %v1223 = vpop.f32.mrf.mxu0
    %v1224 = vpop.f32.mrf.mxu0
    %1225 = vdwg.mxu0
    %v1226 = vadd.f32 %v1139, %v1179
    %v1227 = vadd.f32 %v1140, %v1181
    %v1228 = vadd.f32 %v1141, %v1220
    %v1229 = vadd.f32 %v1142, %v1222
    %v1230 = vmul.f32 %v1226, 0.5
    %v1231 = vmul.f32 %v1227, 0.5
    %v1232 = vmul.f32 %v1228, 0.5
    %v1233 = vtanh.pop %v1230
    %v1234 = vtanh.pop %v1231
    %v1235 = vtanh.pop %v1232
    %v1236 = vmul.f32 %v1233, 0.5
    %v1237 = vmul.f32 %v1234, 0.5
    %v1238 = vmul.f32 %v1235, 0.5
    %v1239 = vadd.f32 %v1236, 0.5
    %v1240 = vadd.f32 %v1237, 0.5
    %v1241 = vadd.f32 %v1238, 0.5
    %v1242 = vtanh.pop %v1229
    %v1243 = vmul.f32 %v1240, %v1136
    %v1244 = vmul.f32 %v1239, %v1242
    %v1245 = vadd.f32 %v1243, %v1244
    %v1246 = vtanh.pop %v1245
    %v1247 = vmul.f32 %v1241, %v1246
    %v1248 = vld [vmem:[#allocation2 + $0xc0] sm:$0xff]
    %v1249 = vld [vmem:[#allocation2 + $0xc8] sm:$0xff]
    %v1250 = vld [vmem:[#allocation2 + $0xd0] sm:$0xff]
    %v1251 = vld [vmem:[#allocation2 + $0xd8] sm:$0xff]
    %v1252 = vpack.c.bf16 %v1247, %v1247
    %1253 = vmatprep.subr.bf16.mxu0 %v673
    %1254 = vmatpush1.bf16.msra.mxu0 %v672
    %1255 = vmatprep.subr.bf16.mxu0 %v669
    %1256 = vmatpush1.bf16.msra.mxu0 %v668
    %1257 = vmatprep.subr.bf16.mxu0 %v665
    %1258 = vmatpush1.bf16.msra.mxu0 %v664
    %1259 = vmatprep.subr.bf16.mxu0 %v661
    %1260 = vmatpush1.bf16.msra.mxu0 %v660
    %1261 = vmatprep.subr.bf16.mxu0 %v657
    %1262 = vmatpush1.bf16.msra.mxu0 %v656
    %1263 = vmatprep.subr.bf16.mxu0 %v653
    %1264 = vmatpush1.bf16.msra.mxu0 %v652
    %1265 = vmatprep.subr.bf16.mxu0 %v649
    %1266 = vmatpush1.bf16.msra.mxu0 %v648
    %1267 = vmatprep.subr.bf16.mxu0 %v645
    %1268 = vmatpush1.bf16.msra.mxu0 %v644
    %1269 = vmatprep.subr.bf16.mxu0 0
    %1270 = vmatpush2.bf16.msra.mxu0 0
    %1271 = vmatprep.subr.bf16.mxu0 0
    %1272 = vmatpush2.bf16.msra.mxu0 0
    %1273 = vmatprep.subr.bf16.mxu0 0
    %1274 = vmatpush2.bf16.msra.mxu0 0
    %1275 = vmatprep.subr.bf16.mxu0 0
    %1276 = vmatpush2.bf16.msra.mxu0 0
    %1277 = vmatprep.subr.bf16.mxu0 0
    %1278 = vmatpush2.bf16.msra.mxu0 0
    %1279 = vmatprep.subr.bf16.mxu0 0
    %1280 = vmatpush2.bf16.msra.mxu0 0
    %1281 = vmatprep.subr.bf16.mxu0 0
    %1282 = vmatpush2.bf16.msra.mxu0 0
    %1283 = vmatprep.subr.bf16.mxu0 0
    %1284 = vmatpush2.bf16.msra.mxu0 0
    %1285 = vmatprep.mubr.bf16.mxu0 0
    %1286 = vmatmul.mubr.bf16.gmra.mxu0 %v1252
    %v1287 = vpop.f32.mrf.mxu0
    %v1288 = vadd.f32 0.0, %v1287
    %v1289 = vpop.f32.mrf.mxu0
    %v1290 = vadd.f32 0.0, %v1289
    %v1291 = vpop.f32.mrf.mxu0
    %v1292 = vpop.f32.mrf.mxu0
    %1293 = vdwg.mxu0
    %1294 = vmatprep.subr.bf16.mxu0 %v675
    %1295 = vmatpush1.bf16.msra.mxu0 %v674
    %1296 = vmatprep.subr.bf16.mxu0 %v671
    %1297 = vmatpush1.bf16.msra.mxu0 %v670
    %1298 = vmatprep.subr.bf16.mxu0 %v667
    %1299 = vmatpush1.bf16.msra.mxu0 %v666
    %1300 = vmatprep.subr.bf16.mxu0 %v663
    %1301 = vmatpush1.bf16.msra.mxu0 %v662
    %1302 = vmatprep.subr.bf16.mxu0 %v659
    %1303 = vmatpush1.bf16.msra.mxu0 %v658
    %1304 = vmatprep.subr.bf16.mxu0 %v655
    %1305 = vmatpush1.bf16.msra.mxu0 %v654
    %1306 = vmatprep.subr.bf16.mxu0 %v651
    %1307 = vmatpush1.bf16.msra.mxu0 %v650
    %1308 = vmatprep.subr.bf16.mxu0 %v647
    %1309 = vmatpush1.bf16.msra.mxu0 %v646
    %1310 = vmatprep.subr.bf16.mxu0 0
    %1311 = vmatpush2.bf16.msra.mxu0 0
    %1312 = vmatprep.subr.bf16.mxu0 0
    %1313 = vmatpush2.bf16.msra.mxu0 0
    %1314 = vmatprep.subr.bf16.mxu0 0
    %1315 = vmatpush2.bf16.msra.mxu0 0
    %1316 = vmatprep.subr.bf16.mxu0 0
    %1317 = vmatpush2.bf16.msra.mxu0 0
    %1318 = vmatprep.subr.bf16.mxu0 0
    %1319 = vmatpush2.bf16.msra.mxu0 0
    %1320 = vmatprep.subr.bf16.mxu0 0
    %1321 = vmatpush2.bf16.msra.mxu0 0
    %1322 = vmatprep.subr.bf16.mxu0 0
    %1323 = vmatpush2.bf16.msra.mxu0 0
    %1324 = vmatprep.subr.bf16.mxu0 0
    %1325 = vmatpush2.bf16.msra.mxu0 0
    %1326 = vmatprep.mubr.bf16.mxu0 0
    %1327 = vmatmul.mubr.bf16.gmra.mxu0 %v1252
    %v1328 = vpop.f32.mrf.mxu0
    %v1329 = vadd.f32 0.0, %v1328
    %v1330 = vpop.f32.mrf.mxu0
    %v1331 = vadd.f32 0.0, %v1330
    %v1332 = vpop.f32.mrf.mxu0
    %v1333 = vpop.f32.mrf.mxu0
    %1334 = vdwg.mxu0
    %v1335 = vadd.f32 %v1248, %v1288
    %v1336 = vadd.f32 %v1249, %v1290
    %v1337 = vadd.f32 %v1250, %v1329
    %v1338 = vadd.f32 %v1251, %v1331
    %v1339 = vmul.f32 %v1335, 0.5
    %v1340 = vmul.f32 %v1336, 0.5
    %v1341 = vmul.f32 %v1337, 0.5
    %v1342 = vtanh.pop %v1339
    %v1343 = vtanh.pop %v1340
    %v1344 = vtanh.pop %v1341
    %v1345 = vmul.f32 %v1342, 0.5
    %v1346 = vmul.f32 %v1343, 0.5
    %v1347 = vmul.f32 %v1344, 0.5
    %v1348 = vadd.f32 %v1345, 0.5
    %v1349 = vadd.f32 %v1346, 0.5
    %v1350 = vadd.f32 %v1347, 0.5
    %v1351 = vtanh.pop %v1338
    %v1352 = vmul.f32 %v1349, %v1245
    %v1353 = vmul.f32 %v1348, %v1351
    %v1354 = vadd.f32 %v1352, %v1353
    %v1355 = vtanh.pop %v1354
    %v1356 = vmul.f32 %v1350, %v1355
    %v1357 = vld [vmem:[#allocation2 + $0xe0] sm:$0xff]
    %v1358 = vld [vmem:[#allocation2 + $0xe8] sm:$0xff]
    %v1359 = vld [vmem:[#allocation2 + $0xf0] sm:$0xff]
    %v1360 = vld [vmem:[#allocation2 + $0xf8] sm:$0xff]
    %v1361 = vpack.c.bf16 %v1356, %v1356
    %1362 = vmatprep.subr.bf16.mxu0 %v673
    %1363 = vmatpush1.bf16.msra.mxu0 %v672
    %1364 = vmatprep.subr.bf16.mxu0 %v669
    %1365 = vmatpush1.bf16.msra.mxu0 %v668
    %1366 = vmatprep.subr.bf16.mxu0 %v665
    %1367 = vmatpush1.bf16.msra.mxu0 %v664
    %1368 = vmatprep.subr.bf16.mxu0 %v661
    %1369 = vmatpush1.bf16.msra.mxu0 %v660
    %1370 = vmatprep.subr.bf16.mxu0 %v657
    %1371 = vmatpush1.bf16.msra.mxu0 %v656
    %1372 = vmatprep.subr.bf16.mxu0 %v653
    %1373 = vmatpush1.bf16.msra.mxu0 %v652
    %1374 = vmatprep.subr.bf16.mxu0 %v649
    %1375 = vmatpush1.bf16.msra.mxu0 %v648
    %1376 = vmatprep.subr.bf16.mxu0 %v645
    %1377 = vmatpush1.bf16.msra.mxu0 %v644
    %1378 = vmatprep.subr.bf16.mxu0 0
    %1379 = vmatpush2.bf16.msra.mxu0 0
    %1380 = vmatprep.subr.bf16.mxu0 0
    %1381 = vmatpush2.bf16.msra.mxu0 0
    %1382 = vmatprep.subr.bf16.mxu0 0
    %1383 = vmatpush2.bf16.msra.mxu0 0
    %1384 = vmatprep.subr.bf16.mxu0 0
    %1385 = vmatpush2.bf16.msra.mxu0 0
    %1386 = vmatprep.subr.bf16.mxu0 0
    %1387 = vmatpush2.bf16.msra.mxu0 0
    %1388 = vmatprep.subr.bf16.mxu0 0
    %1389 = vmatpush2.bf16.msra.mxu0 0
    %1390 = vmatprep.subr.bf16.mxu0 0
    %1391 = vmatpush2.bf16.msra.mxu0 0
    %1392 = vmatprep.subr.bf16.mxu0 0
    %1393 = vmatpush2.bf16.msra.mxu0 0
    %1394 = vmatprep.mubr.bf16.mxu0 0
    %1395 = vmatmul.mubr.bf16.gmra.mxu0 %v1361
    %v1396 = vpop.f32.mrf.mxu0
    %v1397 = vadd.f32 0.0, %v1396
    %v1398 = vpop.f32.mrf.mxu0
    %v1399 = vadd.f32 0.0, %v1398
    %v1400 = vpop.f32.mrf.mxu0
    %v1401 = vpop.f32.mrf.mxu0
    %1402 = vdwg.mxu0
    %1403 = vmatprep.subr.bf16.mxu0 %v675
    %1404 = vmatpush1.bf16.msra.mxu0 %v674
    %1405 = vmatprep.subr.bf16.mxu0 %v671
    %1406 = vmatpush1.bf16.msra.mxu0 %v670
    %1407 = vmatprep.subr.bf16.mxu0 %v667
    %1408 = vmatpush1.bf16.msra.mxu0 %v666
    %1409 = vmatprep.subr.bf16.mxu0 %v663
    %1410 = vmatpush1.bf16.msra.mxu0 %v662
    %1411 = vmatprep.subr.bf16.mxu0 %v659
    %1412 = vmatpush1.bf16.msra.mxu0 %v658
    %1413 = vmatprep.subr.bf16.mxu0 %v655
    %1414 = vmatpush1.bf16.msra.mxu0 %v654
    %1415 = vmatprep.subr.bf16.mxu0 %v651
    %1416 = vmatpush1.bf16.msra.mxu0 %v650
    %1417 = vmatprep.subr.bf16.mxu0 %v647
    %1418 = vmatpush1.bf16.msra.mxu0 %v646
    %1419 = vmatprep.subr.bf16.mxu0 0
    %1420 = vmatpush2.bf16.msra.mxu0 0
    %1421 = vmatprep.subr.bf16.mxu0 0
    %1422 = vmatpush2.bf16.msra.mxu0 0
    %1423 = vmatprep.subr.bf16.mxu0 0
    %1424 = vmatpush2.bf16.msra.mxu0 0
    %1425 = vmatprep.subr.bf16.mxu0 0
    %1426 = vmatpush2.bf16.msra.mxu0 0
    %1427 = vmatprep.subr.bf16.mxu0 0
    %1428 = vmatpush2.bf16.msra.mxu0 0
    %1429 = vmatprep.subr.bf16.mxu0 0
    %1430 = vmatpush2.bf16.msra.mxu0 0
    %1431 = vmatprep.subr.bf16.mxu0 0
    %1432 = vmatpush2.bf16.msra.mxu0 0
    %1433 = vmatprep.subr.bf16.mxu0 0
    %1434 = vmatpush2.bf16.msra.mxu0 0
    %1435 = vmatprep.mubr.bf16.mxu0 0
    %1436 = vmatmul.mubr.bf16.gmra.mxu0 %v1361
    %v1437 = vpop.f32.mrf.mxu0
    %v1438 = vadd.f32 0.0, %v1437
    %v1439 = vpop.f32.mrf.mxu0
    %v1440 = vadd.f32 0.0, %v1439
    %v1441 = vpop.f32.mrf.mxu0
    %v1442 = vpop.f32.mrf.mxu0
    %1443 = vdwg.mxu0
    %v1444 = vadd.f32 %v1357, %v1397
    %v1445 = vadd.f32 %v1358, %v1399
    %v1446 = vadd.f32 %v1359, %v1438
    %v1447 = vadd.f32 %v1360, %v1440
    %v1448 = vmul.f32 %v1444, 0.5
    %v1449 = vmul.f32 %v1445, 0.5
    %v1450 = vmul.f32 %v1446, 0.5
    %v1451 = vtanh.pop %v1448
    %v1452 = vtanh.pop %v1449
    %v1453 = vtanh.pop %v1450
    %v1454 = vmul.f32 %v1451, 0.5
    %v1455 = vmul.f32 %v1452, 0.5
    %v1456 = vmul.f32 %v1453, 0.5
    %v1457 = vadd.f32 %v1454, 0.5
    %v1458 = vadd.f32 %v1455, 0.5
    %v1459 = vadd.f32 %v1456, 0.5
    %v1460 = vtanh.pop %v1447
    %v1461 = vmul.f32 %v1458, %v1354
    %v1462 = vmul.f32 %v1457, %v1460
    %v1463 = vadd.f32 %v1461, %v1462
    %v1464 = vtanh.pop %v1463
    %v1465 = vmul.f32 %v1459, %v1464
    %v1466 = vld [vmem:[#allocation7] sm:$0xff]
    %v1467 = vld [vmem:[#allocation7 + $0x8] sm:$0xff]
    %v1468 = vld [vmem:[#allocation7 + $0x10] sm:$0xff]
    %v1469 = vld [vmem:[#allocation7 + $0x18] sm:$0xff]
    %v1470 = vld [vmem:[#allocation7 + $0x20] sm:$0xff]
    %v1471 = vld [vmem:[#allocation7 + $0x28] sm:$0xff]
    %v1472 = vld [vmem:[#allocation7 + $0x30] sm:$0xff]
    %v1473 = vld [vmem:[#allocation7 + $0x38] sm:$0xff]
    %v1474 = vld [vmem:[#allocation7 + $0x40] sm:$0xff]
    %v1475 = vld [vmem:[#allocation7 + $0x48] sm:$0xff]
    %v1476 = vld [vmem:[#allocation7 + $0x50] sm:$0xff]
    %v1477 = vld [vmem:[#allocation7 + $0x58] sm:$0xff]
    %v1478 = vld [vmem:[#allocation7 + $0x60] sm:$0xff]
    %v1479 = vld [vmem:[#allocation7 + $0x68] sm:$0xff]
    %v1480 = vld [vmem:[#allocation7 + $0x70] sm:$0xff]
    %v1481 = vld [vmem:[#allocation7 + $0x78] sm:$0xff]
    %v1482 = vld [vmem:[%s5] sm:$0x1]
    %v1484 = vlaneseq
    %v1485 = vshrl.u32 %v1484, 7
    %v1486 = vsub.s32 0, %v1485
    %v1487 = vrot.slane %v1482, %v1486
    %1489 = vmatprep.subr.mxu0 0.0
    %1490 = vmatpush1.msra.mxu0 %v1481
    %1491 = vmatprep.subr.mxu0 0.0
    %1492 = vmatpush1.msra.mxu0 %v1480
    %1493 = vmatprep.subr.mxu0 0.0
    %1494 = vmatpush1.msra.mxu0 %v1479
    %1495 = vmatprep.subr.mxu0 0.0
    %1496 = vmatpush1.msra.mxu0 %v1478
    %1497 = vmatprep.subr.mxu0 0.0
    %1498 = vmatpush1.msra.mxu0 %v1477
    %1499 = vmatprep.subr.mxu0 0.0
    %1500 = vmatpush1.msra.mxu0 %v1476
    %1501 = vmatprep.subr.mxu0 0.0
    %1502 = vmatpush1.msra.mxu0 %v1475
    %1503 = vmatprep.subr.mxu0 0.0
    %1504 = vmatpush1.msra.mxu0 %v1474
    %1505 = vmatprep.subr.mxu0 0.0
    %1506 = vmatpush1.msra.mxu0 %v1473
    %1507 = vmatprep.subr.mxu0 0.0
    %1508 = vmatpush1.msra.mxu0 %v1472
    %1509 = vmatprep.subr.mxu0 0.0
    %1510 = vmatpush1.msra.mxu0 %v1471
    %1511 = vmatprep.subr.mxu0 0.0
    %1512 = vmatpush1.msra.mxu0 %v1470
    %1513 = vmatprep.subr.mxu0 0.0
    %1514 = vmatpush1.msra.mxu0 %v1469
    %1515 = vmatprep.subr.mxu0 0.0
    %1516 = vmatpush1.msra.mxu0 %v1468
    %1517 = vmatprep.subr.mxu0 0.0
    %1518 = vmatpush1.msra.mxu0 %v1467
    %1519 = vmatprep.subr.mxu0 0.0
    %1520 = vmatpush1.msra.mxu0 %v1466
    %1521 = vmatprep.subr.mxu0 0.0
    %1522 = vmatpush2.msra.mxu0 0.0
    %1523 = vmatprep.subr.mxu0 0.0
    %1524 = vmatpush2.msra.mxu0 0.0
    %1525 = vmatprep.subr.mxu0 0.0
    %1526 = vmatpush2.msra.mxu0 0.0
    %1527 = vmatprep.subr.mxu0 0.0
    %1528 = vmatpush2.msra.mxu0 0.0
    %1529 = vmatprep.subr.mxu0 0.0
    %1530 = vmatpush2.msra.mxu0 0.0
    %1531 = vmatprep.subr.mxu0 0.0
    %1532 = vmatpush2.msra.mxu0 0.0
    %1533 = vmatprep.subr.mxu0 0.0
    %1534 = vmatpush2.msra.mxu0 0.0
    %1535 = vmatprep.subr.mxu0 0.0
    %1536 = vmatpush2.msra.mxu0 0.0
    %1537 = vmatprep.subr.mxu0 0.0
    %1538 = vmatpush2.msra.mxu0 0.0
    %1539 = vmatprep.subr.mxu0 0.0
    %1540 = vmatpush2.msra.mxu0 0.0
    %1541 = vmatprep.subr.mxu0 0.0
    %1542 = vmatpush2.msra.mxu0 0.0
    %1543 = vmatprep.subr.mxu0 0.0
    %1544 = vmatpush2.msra.mxu0 0.0
    %1545 = vmatprep.subr.mxu0 0.0
    %1546 = vmatpush2.msra.mxu0 0.0
    %1547 = vmatprep.subr.mxu0 0.0
    %1548 = vmatpush2.msra.mxu0 0.0
    %1549 = vmatprep.subr.mxu0 0.0
    %1550 = vmatpush2.msra.mxu0 0.0
    %1551 = vmatprep.subr.mxu0 0.0
    %1552 = vmatpush2.msra.mxu0 0.0
    %1553 = vmatprep.mubr.f32.mxu0 0.0
    %1554 = vmatmul.mubr.f32.gmra.mxu0 %v1465
    %v1555 = vpop.f32.mrf.mxu0
    %v1556 = vadd.f32 %v1487, %v1555
    %v1557 = vpop.f32.mrf.mxu0
    %1558 = vdwg.mxu0
    %1559 = vst [vmem:[%s6] sm:$0xff] %v1556
    // Predicated region
    $region38: #{lstm_forward.1} parent=1 // pred_check
      _
    $region39: #{lstm_forward.1} parent=1 // pred_check_branch
      %1561 = sbr.rel (0) target = $region41
    $region40: #{lstm_forward.1} parent=1 // pred_region
      _
    $region41: #{lstm_forward.1} parent=1 // pred_fallthru
      _
    // Predicated region
    $region42: #{lstm_forward.1} parent=1 // pred_check
      _
    $region43: #{lstm_forward.1} parent=1 // pred_check_branch
      %1563 = sbr.rel (0) target = $region45
    $region44: #{lstm_forward.1} parent=1 // pred_region
      _
    $region45: #{lstm_forward.1} parent=1 // pred_fallthru
      _
    %1564 = vsyncpa [#allocation4], 1
    %1565 = vsyncpa [#allocation6], 1

</llo_original>
